<compile_context>
chip_gen: v7x
topology: tpu7x:2x2x1
jax: 0.10.0
libtpu: 0.0.40
codegen_flags: <defaults>
</compile_context>

<pallas_src>
import functools

import jax
import jax.numpy as jnp
from jax.experimental import pallas as pl
from jax.experimental.pallas import tpu as pltpu


# ---------------------------------------------------------------------------
# Generic fused kernel: multi-dilation 3x3 conv + folded BN + ReLU (+ 1x1 proj)
# ---------------------------------------------------------------------------
def _fused_dilated_conv_kernel(x_ref, w_ref, scale_ref, bias_ref, *rest,
                               dilations, TH, W, Cout, dmax, has_proj):
    """Grid = (N, H//TH, Cin//CT).

    x_ref    : (1, H+2*dmax, W+2*dmax, CT)   bf16, shared zero padding (max dilation)
    w_ref    : (nb, 9, CT, Cout)             bf16, tap-major (kh*3+kw) per branch
    scale_ref: (1, nb*Cout) f32              folded BN scale (gamma / sqrt(var+eps))
    bias_ref : (1, nb*Cout) f32              folded BN bias (+ conv bias folded in)
    [pw_ref  : (nb*Cout, Kp) bf16, pb_ref: (1, Kp) f32]   optional fused 1x1 conv
    o_ref    : (1, TH, W, Kp or nb*Cout)
    acc_ref  : (TH*W, nb*Cout) f32           VMEM scratch accumulator over Cin tiles
    """
    if has_proj:
        pw_ref, pb_ref, o_ref, acc_ref = rest
    else:
        pw_ref = pb_ref = None
        o_ref, acc_ref = rest

    c_step = pl.program_id(2)
    Rw = TH + 2 * dmax                                   # halo row-window height
    row0 = pl.multiple_of(pl.program_id(1) * TH, TH)     # output row-tile start

    @pl.when(c_step == 0)
    def _init():
        acc_ref[...] = jnp.zeros_like(acc_ref)

    # Halo row window for this output row tile, loaded once: (Rw, Wp, CT).
    xw = x_ref[0, pl.ds(row0, Rw)]

    # Distinct column offsets across all branches / kw taps (static python ints).
    # Each shifted+flattened view is built once and reused for every (branch, kh)
    # that needs it: 9 views for the fused ASPP instead of 36 slices.
    col_offs = sorted({dmax + (kw - 1) * d for d in dilations for kw in (0, 1, 2)})
    xcols = {c0: xw[:, c0:c0 + W, :].reshape(Rw * W, -1) for c0 in col_offs}

    for b, d in enumerate(dilations):
        acc_b = jnp.zeros((TH * W, Cout), jnp.float32)
        for kh in range(3):
            r_off = (dmax + (kh - 1) * d) * W            # static row offset in window
            for kw in range(3):
                patch = xcols[dmax + (kw - 1) * d][r_off:r_off + TH * W, :]
                acc_b = acc_b + jnp.dot(patch, w_ref[b, kh * 3 + kw],
                                        preferred_element_type=jnp.float32)
        acc_ref[:, b * Cout:(b + 1) * Cout] += acc_b

    @pl.when(c_step == pl.num_programs(2) - 1)
    def _finalize():
        y = acc_ref[...] * scale_ref[...] + bias_ref[...]   # folded BN (f32)
        y = jnp.maximum(y, 0.0)                             # ReLU
        if has_proj:                                        # fused 1x1 conv + bias
            y = jnp.dot(y.astype(pw_ref.dtype), pw_ref[...],
                        preferred_element_type=jnp.float32) + pb_ref[...]
        o_ref[...] = y.reshape(1, TH, W, -1).astype(o_ref.dtype)


def _pick_row_tile(h, target=8):
    for t in range(min(target, h), 0, -1):
        if h % t == 0:
            return t
    return h


def _pick_cin_tile(cin, target=128):
    # last-dim block must be a multiple of 128 or equal to the full dim
    if cin <= target:
        return cin
    t = (target // 128) * 128
    while t >= 128:
        if cin % t == 0:
            return t
        t -= 128
    return cin


def fused_dilated_conv_bn_relu(x_nhwc, w_taps, scale, bias, dilations,
                               proj_w=None, proj_b=None, out_dtype=jnp.float32,
                               row_tile=8, cin_tile=128):
    """x_nhwc: (N,H,W,Cin); w_taps: (nb,9,Cin,Cout); scale/bias: (nb*Cout,)."""
    N, H, W, Cin = x_nhwc.shape
    nb, nine, cin_w, Cout = w_taps.shape
    assert nine == 9 and cin_w == Cin and nb == len(dilations)
    dmax = int(max(dilations))
    TH = _pick_row_tile(H, row_tile)
    CT = _pick_cin_tile(Cin, cin_tile)
    Hp, Wp = H + 2 * dmax, W + 2 * dmax
    K = nb * Cout

    # bf16 operands (MXU rate, half DMA); single shared zero pad with max dilation.
    xpad = jnp.pad(x_nhwc.astype(jnp.bfloat16), ((0, 0), (dmax, dmax), (dmax, dmax), (0, 0)))
    w_bf = w_taps.astype(jnp.bfloat16)
    scale2 = scale.reshape(1, K).astype(jnp.float32)
    bias2 = bias.reshape(1, K).astype(jnp.float32)

    has_proj = proj_w is not None
    Kout = int(proj_w.shape[-1]) if has_proj else K

    in_specs = [
        pl.BlockSpec((1, Hp, Wp, CT), lambda n, h, c: (n, 0, 0, c)),
        pl.BlockSpec((nb, 9, CT, Cout), lambda n, h, c: (0, 0, c, 0)),
        pl.BlockSpec((1, K), lambda n, h, c: (0, 0)),
        pl.BlockSpec((1, K), lambda n, h, c: (0, 0)),
    ]
    args = [xpad, w_bf, scale2, bias2]
    if has_proj:
        in_specs += [
            pl.BlockSpec((K, Kout), lambda n, h, c: (0, 0)),
            pl.BlockSpec((1, Kout), lambda n, h, c: (0, 0)),
        ]
        args += [proj_w.astype(jnp.bfloat16),
                 proj_b.reshape(1, Kout).astype(jnp.float32)]

    kern = functools.partial(_fused_dilated_conv_kernel,
                             dilations=tuple(int(d) for d in dilations),
                             TH=TH, W=W, Cout=Cout, dmax=dmax, has_proj=has_proj)

    return pl.pallas_call(
        kern,
        out_shape=jax.ShapeDtypeStruct((N, H, W, Kout), out_dtype),
        grid=(N, H // TH, Cin // CT),
        in_specs=in_specs,
        out_specs=pl.BlockSpec((1, TH, W, Kout), lambda n, h, c: (n, h, 0, 0)),
        scratch_shapes=[pltpu.VMEM((TH * W, K), jnp.float32)],
        compiler_params=pltpu.CompilerParams(
            dimension_semantics=("parallel", "parallel", "arbitrary"),
            vmem_limit_bytes=32 * 1024 * 1024,
        ),
    )(*args)


# ---------------------------------------------------------------------------
# Parameters (synthetic, deterministic) + Decoder forward
# ---------------------------------------------------------------------------
def init_decoder_params(key, c4, c5, dsn_mid, aspp_out, l6_mid, num_classes, eps=1e-5):
    def conv_bn(k, cin, cout, conv_bias):
        kw_, kb_, kg, kbeta, km, kv = jax.random.split(k, 6)
        w = 0.05 * jax.random.normal(kw_, (cout, cin, 3, 3), jnp.float32)   # torch OIHW
        cb = (0.05 * jax.random.normal(kb_, (cout,), jnp.float32)
              if conv_bias else jnp.zeros((cout,), jnp.float32))
        gamma = 1.0 + 0.1 * jax.random.normal(kg, (cout,), jnp.float32)
        beta = 0.1 * jax.random.normal(kbeta, (cout,), jnp.float32)
        mean = 0.1 * jax.random.normal(km, (cout,), jnp.float32)
        var = 0.5 + 0.5 * jnp.abs(jax.random.normal(kv, (cout,), jnp.float32))
        scale = gamma / jnp.sqrt(var + eps)                 # InPlaceABNSync fold (eval)
        bias = beta + (cb - mean) * scale                   # conv bias folded into BN bias
        w_taps = jnp.transpose(w, (2, 3, 1, 0)).reshape(9, cin, cout)
        return dict(w=w, w_taps=w_taps, scale=scale, bias=bias)

    def conv1x1(k, cin, cout):
        kw_, kb_ = jax.random.split(k)
        w = 0.05 * jax.random.normal(kw_, (cout, cin, 1, 1), jnp.float32)
        b = 0.05 * jax.random.normal(kb_, (cout,), jnp.float32)
        return dict(w=w, b=b, pw=jnp.transpose(w[:, :, 0, 0], (1, 0)))       # (cin, cout)

    ks = jax.random.split(key, 5)
    dsn_c1 = conv_bn(ks[0], c4, dsn_mid, conv_bias=True)
    dsn_c2 = conv1x1(ks[1], dsn_mid, num_classes)

    dils = (6, 12, 18, 24)
    branches = [conv_bn(jax.random.fold_in(ks[2], i), c5, aspp_out, conv_bias=False)
                for i in range(4)]
    aspp = dict(dilations=dils,
                w=[b_["w"] for b_ in branches],
                w_taps=jnp.stack([b_["w_taps"] for b_ in branches], axis=0),
                scale=jnp.concatenate([b_["scale"] for b_ in branches]),
                bias=jnp.concatenate([b_["bias"] for b_ in branches]))

    l6_c1 = conv_bn(ks[3], 4 * aspp_out, l6_mid, conv_bias=False)
    l6_c2 = conv1x1(ks[4], l6_mid, num_classes)

    return dict(
        dsn=dict(w=dsn_c1["w"], w_taps=dsn_c1["w_taps"][None], scale=dsn_c1["scale"],
                 bias=dsn_c1["bias"], pw=dsn_c2["pw"], pb=dsn_c2["b"]),
        aspp=aspp,
        l6=dict(w=l6_c1["w"], w_taps=l6_c1["w_taps"][None], scale=l6_c1["scale"],
                bias=l6_c1["bias"], pw=l6_c2["pw"], pb=l6_c2["b"]),
    )


def decoder_forward(xs, params):
    """Decoder forward. xs: list of NCHW feature maps; uses xs[-2] and xs[-1]."""
    x4 = jnp.transpose(xs[-2], (0, 2, 3, 1))   # NHWC
    x5 = jnp.transpose(xs[-1], (0, 2, 3, 1))

    # layer_dsn: 3x3(+bias)+BN+ReLU with the 1x1(+bias) projection fused in the epilogue.
    p = params["dsn"]
    x_dsn = fused_dilated_conv_bn_relu(x4, p["w_taps"], p["scale"], p["bias"],
                                       dilations=(1,), proj_w=p["pw"], proj_b=p["pb"],
                                       out_dtype=jnp.float32)

    # layer5 (ASPP): all 4 dilation branches fused into one kernel -> (N,H,W,4*Ca) slab.
    a = params["aspp"]
    slab = fused_dilated_conv_bn_relu(x5, a["w_taps"], a["scale"], a["bias"],
                                      dilations=a["dilations"], out_dtype=jnp.bfloat16)

    # layer6: 3x3+BN+ReLU with the 1x1(+bias) projection fused in the epilogue.
    q = params["l6"]
    x_seg = fused_dilated_conv_bn_relu(slab, q["w_taps"], q["scale"], q["bias"],
                                       dilations=(1,), proj_w=q["pw"], proj_b=q["pb"],
                                       out_dtype=jnp.float32)

    return [jnp.transpose(x_seg, (0, 3, 1, 2)), jnp.transpose(x_dsn, (0, 3, 1, 2))]


# ---------------------------------------------------------------------------
# Pure-JAX reference (lax.conv_general_dilated) mirroring the kernel's bf16 rounding
# ---------------------------------------------------------------------------
def _reference_decoder(xs, params):
    def conv3x3_bf16(x_nhwc, w_torch, d):
        w_hwio = jnp.transpose(w_torch, (2, 3, 1, 0)).astype(jnp.bfloat16)
        return jax.lax.conv_general_dilated(
            x_nhwc.astype(jnp.bfloat16), w_hwio, (1, 1), [(d, d), (d, d)],
            rhs_dilation=(d, d), dimension_numbers=("NHWC", "HWIO", "NHWC"),
            preferred_element_type=jnp.float32)

    def proj1x1(y_f32, pw, pb):
        return jnp.einsum("nhwc,ck->nhwk", y_f32.astype(jnp.bfloat16),
                          pw.astype(jnp.bfloat16),
                          preferred_element_type=jnp.float32) + pb

    x4 = jnp.transpose(xs[-2], (0, 2, 3, 1))
    x5 = jnp.transpose(xs[-1], (0, 2, 3, 1))

    p = params["dsn"]
    y = jnp.maximum(conv3x3_bf16(x4, p["w"], 1) * p["scale"] + p["bias"], 0.0)
    x_dsn = proj1x1(y, p["pw"], p["pb"])

    a = params["aspp"]
    C = a["w_taps"].shape[-1]
    outs = []
    for b, d in enumerate(a["dilations"]):
        y = conv3x3_bf16(x5, a["w"][b], d)
        y = y * a["scale"][b * C:(b + 1) * C] + a["bias"][b * C:(b + 1) * C]
        outs.append(jnp.maximum(y, 0.0))
    slab = jnp.concatenate(outs, axis=-1).astype(jnp.bfloat16)

    q = params["l6"]
    y = jnp.maximum(conv3x3_bf16(slab, q["w"], 1) * q["scale"] + q["bias"], 0.0)
    x_seg = proj1x1(y, q["pw"], q["pb"])

    return [jnp.transpose(x_seg, (0, 3, 1, 2)), jnp.transpose(x_dsn, (0, 3, 1, 2))]


if __name__ == "__main__":
    key = jax.random.PRNGKey(0)
    kx4, kx5, kp = jax.random.split(key, 3)

    # Small stand-ins for the real Decoder sizes (1024/2048/512/256 channels).
    N, H, W = 2, 16, 16
    C4, C5 = 128, 256              # x[-2], x[-1] channels
    DSN_MID, ASPP_OUT, L6_MID, NUM_CLASSES = 64, 128, 64, 8

    x4 = jax.random.normal(kx4, (N, C4, H, W), jnp.float32)
    x5 = jax.random.normal(kx5, (N, C5, H, W), jnp.float32)
    params = init_decoder_params(kp, C4, C5, DSN_MID, ASPP_OUT, L6_MID, NUM_CLASSES)

    x_seg, x_dsn = decoder_forward([x4, x5], params)
    x_seg = jax.block_until_ready(x_seg)
    x_dsn = jax.block_until_ready(x_dsn)

    assert x_seg.shape == (N, NUM_CLASSES, H, W), x_seg.shape
    assert x_dsn.shape == (N, NUM_CLASSES, H, W), x_dsn.shape

    ref_seg, ref_dsn = _reference_decoder([x4, x5], params)
    ref_seg = jax.block_until_ready(ref_seg)
    ref_dsn = jax.block_until_ready(ref_dsn)

    err_seg = float(jnp.max(jnp.abs(x_seg - ref_seg)))
    err_dsn = float(jnp.max(jnp.abs(x_dsn - ref_dsn)))
    assert jnp.allclose(x_seg, ref_seg, atol=2e-2, rtol=2e-2), err_seg
    assert jnp.allclose(x_dsn, ref_dsn, atol=2e-2, rtol=2e-2), err_dsn

    print("KERNEL_OK")
</pallas_src>

<mosaic_0001>
module attributes {stable_mosaic.version = 11 : i64} {
  func.func @_fused_dilated_conv_kernel(%arg0: i32, %arg1: i32, %arg2: i32, %arg3: memref<1x18x18x128xbf16, #tpu.memory_space<vmem>>, %arg4: memref<1x9x128x64xbf16, #tpu.memory_space<vmem>>, %arg5: memref<1x64xf32, #tpu.memory_space<vmem>>, %arg6: memref<1x64xf32, #tpu.memory_space<vmem>>, %arg7: memref<64x8xbf16, #tpu.memory_space<vmem>>, %arg8: memref<1x8xf32, #tpu.memory_space<vmem>>, %arg9: memref<1x8x16x8xf32, #tpu.memory_space<vmem>>, %arg10: memref<128x64xf32, #tpu.memory_space<vmem>>) attributes {dimension_semantics = [#tpu.dimension_semantics<parallel>, #tpu.dimension_semantics<parallel>, #tpu.dimension_semantics<arbitrary>], iteration_bounds = array<i64: 2, 2, 1>, scalar_prefetch = 0 : i64, scratch_operands = 1 : i64, tpu.core_type = #tpu.core_type<tc>, window_params = [{transform_indices = @transform_0, window_bounds = array<i64: 1, 18, 18, 128>}, {transform_indices = @transform_1, window_bounds = array<i64: 1, 9, 128, 64>}, {pipeline_mode = #tpu.pipeline_mode<synchronous>, transform_indices = @transform_2, window_bounds = array<i64: 1, 64>}, {pipeline_mode = #tpu.pipeline_mode<synchronous>, transform_indices = @transform_3, window_bounds = array<i64: 1, 64>}, {pipeline_mode = #tpu.pipeline_mode<synchronous>, transform_indices = @transform_4, window_bounds = array<i64: 64, 8>}, {pipeline_mode = #tpu.pipeline_mode<synchronous>, transform_indices = @transform_5, window_bounds = array<i64: 1, 8>}, {transform_indices = @transform_6, window_bounds = array<i64: 1, 8, 16, 8>}]} {
    %c8_i32 = arith.constant 8 : i32
    %0 = arith.muli %arg1, %c8_i32 : i32
    %1 = tpu.assume_multiple %0, 8 : i32
    %c0_i32 = arith.constant 0 : i32
    %2 = arith.cmpi eq, %arg2, %c0_i32 : i32
    %3 = arith.extui %2 : i1 to i32
    %c0_i32_0 = arith.constant 0 : i32
    %4 = arith.cmpi ne, %3, %c0_i32_0 : i32
    scf.if %4 {
      %cst_46 = arith.constant 0.000000e+00 : f32
      %66 = vector.broadcast %cst_46 : f32 to vector<128x64xf32>
      %c0_47 = arith.constant 0 : index
      %c0_48 = arith.constant 0 : index
      %67 = vector.load %arg10[%c0_47, %c0_48] : memref<128x64xf32, #tpu.memory_space<vmem>>, vector<128x64xf32>
      tpu.vector_store %arg10[%c0_47, %c0_48], %66 {strides = array<i32>} : memref<128x64xf32, #tpu.memory_space<vmem>>, vector<128x64xf32>,
    } else {
    }
    %c0 = arith.constant 0 : index
    %5 = arith.index_cast %1 : i32 to index
    %c0_1 = arith.constant 0 : index
    %c0_2 = arith.constant 0 : index
    %6 = vector.load %arg3[%c0, %5, %c0_1, %c0_2] : memref<1x18x18x128xbf16, #tpu.memory_space<vmem>>, vector<1x10x18x128xbf16>
    %7 = vector.shape_cast %6 : vector<1x10x18x128xbf16> to vector<10x18x128xbf16>
    %8 = vector.extract_strided_slice %7 {offsets = [0, 0, 0], sizes = [10, 16, 128], strides = [1, 1, 1]} : vector<10x18x128xbf16> to vector<10x16x128xbf16>
    %9 = vector.shape_cast %8 : vector<10x16x128xbf16> to vector<160x128xbf16>
    %10 = vector.extract_strided_slice %7 {offsets = [0, 1, 0], sizes = [10, 16, 128], strides = [1, 1, 1]} : vector<10x18x128xbf16> to vector<10x16x128xbf16>
    %11 = vector.shape_cast %10 : vector<10x16x128xbf16> to vector<160x128xbf16>
    %12 = vector.extract_strided_slice %7 {offsets = [0, 2, 0], sizes = [10, 16, 128], strides = [1, 1, 1]} : vector<10x18x128xbf16> to vector<10x16x128xbf16>
    %13 = vector.shape_cast %12 : vector<10x16x128xbf16> to vector<160x128xbf16>
    %cst = arith.constant 0.000000e+00 : f32
    %14 = vector.broadcast %cst : f32 to vector<128x64xf32>
    %15 = vector.extract_strided_slice %9 {offsets = [0, 0], sizes = [128, 128], strides = [1, 1]} : vector<160x128xbf16> to vector<128x128xbf16>
    %c0_3 = arith.constant 0 : index
    %c0_4 = arith.constant 0 : index
    %c0_5 = arith.constant 0 : index
    %c0_6 = arith.constant 0 : index
    %16 = vector.load %arg4[%c0_3, %c0_4, %c0_5, %c0_6] : memref<1x9x128x64xbf16, #tpu.memory_space<vmem>>, vector<1x1x128x64xbf16>
    %17 = vector.shape_cast %16 : vector<1x1x128x64xbf16> to vector<128x64xbf16>
    %cst_7 = arith.constant dense<0.000000e+00> : vector<128x64xf32>
    %18 = tpu.matmul %15, %17, %cst_7 {dimension_numbers = #tpu.dot_dimension_numbers<[1], [0], [0], [1], [0, 0, 1, 1], [], []>} : vector<128x128xbf16>, vector<128x64xbf16>, vector<128x64xf32> -> vector<128x64xf32>
    %19 = arith.addf %14, %18 : vector<128x64xf32>
    %20 = vector.extract_strided_slice %11 {offsets = [0, 0], sizes = [128, 128], strides = [1, 1]} : vector<160x128xbf16> to vector<128x128xbf16>
    %c0_8 = arith.constant 0 : index
    %c1 = arith.constant 1 : index
    %c0_9 = arith.constant 0 : index
    %c0_10 = arith.constant 0 : index
    %21 = vector.load %arg4[%c0_8, %c1, %c0_9, %c0_10] : memref<1x9x128x64xbf16, #tpu.memory_space<vmem>>, vector<1x1x128x64xbf16>
    %22 = vector.shape_cast %21 : vector<1x1x128x64xbf16> to vector<128x64xbf16>
    %cst_11 = arith.constant dense<0.000000e+00> : vector<128x64xf32>
    %23 = tpu.matmul %20, %22, %cst_11 {dimension_numbers = #tpu.dot_dimension_numbers<[1], [0], [0], [1], [0, 0, 1, 1], [], []>} : vector<128x128xbf16>, vector<128x64xbf16>, vector<128x64xf32> -> vector<128x64xf32>
    %24 = arith.addf %19, %23 : vector<128x64xf32>
    %25 = vector.extract_strided_slice %13 {offsets = [0, 0], sizes = [128, 128], strides = [1, 1]} : vector<160x128xbf16> to vector<128x128xbf16>
    %c0_12 = arith.constant 0 : index
    %c2 = arith.constant 2 : index
    %c0_13 = arith.constant 0 : index
    %c0_14 = arith.constant 0 : index
    %26 = vector.load %arg4[%c0_12, %c2, %c0_13, %c0_14] : memref<1x9x128x64xbf16, #tpu.memory_space<vmem>>, vector<1x1x128x64xbf16>
    %27 = vector.shape_cast %26 : vector<1x1x128x64xbf16> to vector<128x64xbf16>
    %cst_15 = arith.constant dense<0.000000e+00> : vector<128x64xf32>
    %28 = tpu.matmul %25, %27, %cst_15 {dimension_numbers = #tpu.dot_dimension_numbers<[1], [0], [0], [1], [0, 0, 1, 1], [], []>} : vector<128x128xbf16>, vector<128x64xbf16>, vector<128x64xf32> -> vector<128x64xf32>
    %29 = arith.addf %24, %28 : vector<128x64xf32>
    %30 = vector.extract_strided_slice %9 {offsets = [16, 0], sizes = [128, 128], strides = [1, 1]} : vector<160x128xbf16> to vector<128x128xbf16>
    %c0_16 = arith.constant 0 : index
    %c3 = arith.constant 3 : index
    %c0_17 = arith.constant 0 : index
    %c0_18 = arith.constant 0 : index
    %31 = vector.load %arg4[%c0_16, %c3, %c0_17, %c0_18] : memref<1x9x128x64xbf16, #tpu.memory_space<vmem>>, vector<1x1x128x64xbf16>
    %32 = vector.shape_cast %31 : vector<1x1x128x64xbf16> to vector<128x64xbf16>
    %cst_19 = arith.constant dense<0.000000e+00> : vector<128x64xf32>
    %33 = tpu.matmul %30, %32, %cst_19 {dimension_numbers = #tpu.dot_dimension_numbers<[1], [0], [0], [1], [0, 0, 1, 1], [], []>} : vector<128x128xbf16>, vector<128x64xbf16>, vector<128x64xf32> -> vector<128x64xf32>
    %34 = arith.addf %29, %33 : vector<128x64xf32>
    %35 = vector.extract_strided_slice %11 {offsets = [16, 0], sizes = [128, 128], strides = [1, 1]} : vector<160x128xbf16> to vector<128x128xbf16>
    %c0_20 = arith.constant 0 : index
    %c4 = arith.constant 4 : index
    %c0_21 = arith.constant 0 : index
    %c0_22 = arith.constant 0 : index
    %36 = vector.load %arg4[%c0_20, %c4, %c0_21, %c0_22] : memref<1x9x128x64xbf16, #tpu.memory_space<vmem>>, vector<1x1x128x64xbf16>
    %37 = vector.shape_cast %36 : vector<1x1x128x64xbf16> to vector<128x64xbf16>
    %cst_23 = arith.constant dense<0.000000e+00> : vector<128x64xf32>
    %38 = tpu.matmul %35, %37, %cst_23 {dimension_numbers = #tpu.dot_dimension_numbers<[1], [0], [0], [1], [0, 0, 1, 1], [], []>} : vector<128x128xbf16>, vector<128x64xbf16>, vector<128x64xf32> -> vector<128x64xf32>
    %39 = arith.addf %34, %38 : vector<128x64xf32>
    %40 = vector.extract_strided_slice %13 {offsets = [16, 0], sizes = [128, 128], strides = [1, 1]} : vector<160x128xbf16> to vector<128x128xbf16>
    %c0_24 = arith.constant 0 : index
    %c5 = arith.constant 5 : index
    %c0_25 = arith.constant 0 : index
    %c0_26 = arith.constant 0 : index
    %41 = vector.load %arg4[%c0_24, %c5, %c0_25, %c0_26] : memref<1x9x128x64xbf16, #tpu.memory_space<vmem>>, vector<1x1x128x64xbf16>
    %42 = vector.shape_cast %41 : vector<1x1x128x64xbf16> to vector<128x64xbf16>
    %cst_27 = arith.constant dense<0.000000e+00> : vector<128x64xf32>
    %43 = tpu.matmul %40, %42, %cst_27 {dimension_numbers = #tpu.dot_dimension_numbers<[1], [0], [0], [1], [0, 0, 1, 1], [], []>} : vector<128x128xbf16>, vector<128x64xbf16>, vector<128x64xf32> -> vector<128x64xf32>
    %44 = arith.addf %39, %43 : vector<128x64xf32>
    %45 = vector.extract_strided_slice %9 {offsets = [32, 0], sizes = [128, 128], strides = [1, 1]} : vector<160x128xbf16> to vector<128x128xbf16>
    %c0_28 = arith.constant 0 : index
    %c6 = arith.constant 6 : index
    %c0_29 = arith.constant 0 : index
    %c0_30 = arith.constant 0 : index
    %46 = vector.load %arg4[%c0_28, %c6, %c0_29, %c0_30] : memref<1x9x128x64xbf16, #tpu.memory_space<vmem>>, vector<1x1x128x64xbf16>
    %47 = vector.shape_cast %46 : vector<1x1x128x64xbf16> to vector<128x64xbf16>
    %cst_31 = arith.constant dense<0.000000e+00> : vector<128x64xf32>
    %48 = tpu.matmul %45, %47, %cst_31 {dimension_numbers = #tpu.dot_dimension_numbers<[1], [0], [0], [1], [0, 0, 1, 1], [], []>} : vector<128x128xbf16>, vector<128x64xbf16>, vector<128x64xf32> -> vector<128x64xf32>
    %49 = arith.addf %44, %48 : vector<128x64xf32>
    %50 = vector.extract_strided_slice %11 {offsets = [32, 0], sizes = [128, 128], strides = [1, 1]} : vector<160x128xbf16> to vector<128x128xbf16>
    %c0_32 = arith.constant 0 : index
    %c7 = arith.constant 7 : index
    %c0_33 = arith.constant 0 : index
    %c0_34 = arith.constant 0 : index
    %51 = vector.load %arg4[%c0_32, %c7, %c0_33, %c0_34] : memref<1x9x128x64xbf16, #tpu.memory_space<vmem>>, vector<1x1x128x64xbf16>
    %52 = vector.shape_cast %51 : vector<1x1x128x64xbf16> to vector<128x64xbf16>
    %cst_35 = arith.constant dense<0.000000e+00> : vector<128x64xf32>
    %53 = tpu.matmul %50, %52, %cst_35 {dimension_numbers = #tpu.dot_dimension_numbers<[1], [0], [0], [1], [0, 0, 1, 1], [], []>} : vector<128x128xbf16>, vector<128x64xbf16>, vector<128x64xf32> -> vector<128x64xf32>
    %54 = arith.addf %49, %53 : vector<128x64xf32>
    %55 = vector.extract_strided_slice %13 {offsets = [32, 0], sizes = [128, 128], strides = [1, 1]} : vector<160x128xbf16> to vector<128x128xbf16>
    %c0_36 = arith.constant 0 : index
    %c8 = arith.constant 8 : index
    %c0_37 = arith.constant 0 : index
    %c0_38 = arith.constant 0 : index
    %56 = vector.load %arg4[%c0_36, %c8, %c0_37, %c0_38] : memref<1x9x128x64xbf16, #tpu.memory_space<vmem>>, vector<1x1x128x64xbf16>
    %57 = vector.shape_cast %56 : vector<1x1x128x64xbf16> to vector<128x64xbf16>
    %cst_39 = arith.constant dense<0.000000e+00> : vector<128x64xf32>
    %58 = tpu.matmul %55, %57, %cst_39 {dimension_numbers = #tpu.dot_dimension_numbers<[1], [0], [0], [1], [0, 0, 1, 1], [], []>} : vector<128x128xbf16>, vector<128x64xbf16>, vector<128x64xf32> -> vector<128x64xf32>
    %59 = arith.addf %54, %58 : vector<128x64xf32>
    %c0_40 = arith.constant 0 : index
    %c0_41 = arith.constant 0 : index
    %60 = vector.load %arg10[%c0_40, %c0_41] : memref<128x64xf32, #tpu.memory_space<vmem>>, vector<128x64xf32>
    %61 = arith.addf %60, %59 : vector<128x64xf32>
    %c0_42 = arith.constant 0 : index
    %c0_43 = arith.constant 0 : index
    %62 = vector.load %arg10[%c0_42, %c0_43] : memref<128x64xf32, #tpu.memory_space<vmem>>, vector<128x64xf32>
    tpu.vector_store %arg10[%c0_42, %c0_43], %61 {strides = array<i32>} : memref<128x64xf32, #tpu.memory_space<vmem>>, vector<128x64xf32>,
    %c0_i32_44 = arith.constant 0 : i32
    %63 = arith.cmpi eq, %arg2, %c0_i32_44 : i32
    %64 = arith.extui %63 : i1 to i32
    %c0_i32_45 = arith.constant 0 : i32
    %65 = arith.cmpi ne, %64, %c0_i32_45 : i32
    scf.if %65 {
      %c0_46 = arith.constant 0 : index
      %c0_47 = arith.constant 0 : index
      %66 = vector.load %arg10[%c0_46, %c0_47] : memref<128x64xf32, #tpu.memory_space<vmem>>, vector<128x64xf32>
      %c0_48 = arith.constant 0 : index
      %c0_49 = arith.constant 0 : index
      %67 = vector.load %arg5[%c0_48, %c0_49] : memref<1x64xf32, #tpu.memory_space<vmem>>, vector<1x64xf32>
      %68 = vector.broadcast %67 : vector<1x64xf32> to vector<128x64xf32>
      %69 = arith.mulf %66, %68 : vector<128x64xf32>
      %c0_50 = arith.constant 0 : index
      %c0_51 = arith.constant 0 : index
      %70 = vector.load %arg6[%c0_50, %c0_51] : memref<1x64xf32, #tpu.memory_space<vmem>>, vector<1x64xf32>
      %71 = vector.broadcast %70 : vector<1x64xf32> to vector<128x64xf32>
      %72 = arith.addf %69, %71 : vector<128x64xf32>
      %cst_52 = arith.constant 0.000000e+00 : f32
      %73 = vector.broadcast %cst_52 : f32 to vector<128x64xf32>
      %74 = arith.maximumf %72, %73 : vector<128x64xf32>
      %75 = arith.truncf %74 : vector<128x64xf32> to vector<128x64xbf16>
      %c0_53 = arith.constant 0 : index
      %c0_54 = arith.constant 0 : index
      %76 = vector.load %arg7[%c0_53, %c0_54] : memref<64x8xbf16, #tpu.memory_space<vmem>>, vector<64x8xbf16>
      %cst_55 = arith.constant dense<0.000000e+00> : vector<128x8xf32>
      %77 = tpu.matmul %75, %76, %cst_55 {dimension_numbers = #tpu.dot_dimension_numbers<[1], [0], [0], [1], [0, 0, 1, 1], [], []>} : vector<128x64xbf16>, vector<64x8xbf16>, vector<128x8xf32> -> vector<128x8xf32>
      %c0_56 = arith.constant 0 : index
      %c0_57 = arith.constant 0 : index
      %78 = vector.load %arg8[%c0_56, %c0_57] : memref<1x8xf32, #tpu.memory_space<vmem>>, vector<1x8xf32>
      %79 = vector.broadcast %78 : vector<1x8xf32> to vector<128x8xf32>
      %80 = arith.addf %77, %79 : vector<128x8xf32>
      %81 = vector.shape_cast %80 : vector<128x8xf32> to vector<1x8x16x8xf32>
      %c0_58 = arith.constant 0 : index
      %c0_59 = arith.constant 0 : index
      %c0_60 = arith.constant 0 : index
      %c0_61 = arith.constant 0 : index
      %82 = vector.load %arg9[%c0_58, %c0_59, %c0_60, %c0_61] : memref<1x8x16x8xf32, #tpu.memory_space<vmem>>, vector<1x8x16x8xf32>
      tpu.vector_store %arg9[%c0_58, %c0_59, %c0_60, %c0_61], %81 {strides = array<i32>} : memref<1x8x16x8xf32, #tpu.memory_space<vmem>>, vector<1x8x16x8xf32>,
    } else {
    }
    return
  }
  func.func @transform_0(%arg0: i32, %arg1: i32, %arg2: i32) -> (i32, i32, i32, i32) {
    %c0_i32 = arith.constant 0 : i32
    %c0_i32_0 = arith.constant 0 : i32
    %c0_i32_1 = arith.constant 0 : i32
    return %arg0, %c0_i32, %c0_i32_0, %arg2 : i32, i32, i32, i32
  }
  func.func @transform_1(%arg0: i32, %arg1: i32, %arg2: i32) -> (i32, i32, i32, i32) {
    %c0_i32 = arith.constant 0 : i32
    %c0_i32_0 = arith.constant 0 : i32
    %c0_i32_1 = arith.constant 0 : i32
    %c0_i32_2 = arith.constant 0 : i32
    return %c0_i32, %c0_i32_0, %arg2, %c0_i32_1 : i32, i32, i32, i32
  }
  func.func @transform_2(%arg0: i32, %arg1: i32, %arg2: i32) -> (i32, i32) {
    %c0_i32 = arith.constant 0 : i32
    %c0_i32_0 = arith.constant 0 : i32
    %c0_i32_1 = arith.constant 0 : i32
    return %c0_i32, %c0_i32_0 : i32, i32
  }
  func.func @transform_3(%arg0: i32, %arg1: i32, %arg2: i32) -> (i32, i32) {
    %c0_i32 = arith.constant 0 : i32
    %c0_i32_0 = arith.constant 0 : i32
    %c0_i32_1 = arith.constant 0 : i32
    return %c0_i32, %c0_i32_0 : i32, i32
  }
  func.func @transform_4(%arg0: i32, %arg1: i32, %arg2: i32) -> (i32, i32) {
    %c0_i32 = arith.constant 0 : i32
    %c0_i32_0 = arith.constant 0 : i32
    %c0_i32_1 = arith.constant 0 : i32
    return %c0_i32, %c0_i32_0 : i32, i32
  }
  func.func @transform_5(%arg0: i32, %arg1: i32, %arg2: i32) -> (i32, i32) {
    %c0_i32 = arith.constant 0 : i32
    %c0_i32_0 = arith.constant 0 : i32
    %c0_i32_1 = arith.constant 0 : i32
    return %c0_i32, %c0_i32_0 : i32, i32
  }
  func.func @transform_6(%arg0: i32, %arg1: i32, %arg2: i32) -> (i32, i32, i32, i32) {
    %c0_i32 = arith.constant 0 : i32
    %c0_i32_0 = arith.constant 0 : i32
    %c0_i32_1 = arith.constant 0 : i32
    return %arg0, %arg1, %c0_i32, %c0_i32_0 : i32, i32, i32, i32
  }
}

</mosaic_0001>

<llo_original>
// kernel: tpu_custom_call.1
$region0: #{tpu_custom_call.1}
  #allocation0 [shape = 'u32[]', space=smem, size = 0x4, offset = 0x4, fixed_abs, tag = 'smem constant byte address 0x4 - core index']
  #allocation1 [shape = 'u32[144,128]{1,0:T(1,128)}', space=vmem, size = 0x12000, scoped, tag = 'internal scratch']
  #allocation2 [shape = 'f32[128,64]{1,0:T(8,128)}', space=vmem, size = 0x10000, scoped, tag = 'scratch operand']
  %s0 = inlined_call_operand.vmem [shape: bf16[2,18,18,128], index: 0, kind: input, shape index: {}]
  %s1 = inlined_call_operand.vmem [shape: bf16[1,9,128,64], index: 1, kind: input, shape index: {}]
  %s2 = inlined_call_operand.vmem [shape: f32[1,64], index: 2, kind: input, shape index: {}]
  %s3 = inlined_call_operand.vmem [shape: f32[1,64], index: 3, kind: input, shape index: {}]
  %s4 = inlined_call_operand.vmem [shape: bf16[64,8], index: 4, kind: input, shape index: {}]
  %s5 = inlined_call_operand.vmem [shape: f32[1,8], index: 5, kind: input, shape index: {}]
  %s6 = inlined_call_operand.vmem [shape: f32[2,16,16,8], index: 6, kind: output, shape index: {}]
  %s7 = sld [smem:[#allocation0]]
  $region65: #{tpu_custom_call.1} parent=0
    _
  %s9 = ssub.s32 1, %s7
  %s10 = scalar_select 0, %s9, %s7
  loop: start=0, step=1, limit=6
  $region2: #{tpu_custom_call.1} parent=0 // loop_pre_header
    _
  $region3: #{tpu_custom_call.1} parent=0 // loop_header
    %s12 = sphi 0, %s16
    %p13 = scmp.ge.s32.totalorder %s12, 6
    %s19 = sphi 0, %s38
    %s20 = sphi 0, %s34
    %s21 = sphi 0, %s30
    %s22 = sphi 0, %s19
    %s23 = sphi 0, %s20
    %s24 = sphi 0, %s21
    %s25 = sphi 0, %s22
    %s26 = sphi 0, %s23
    %s27 = sphi 0, %s24
    %s43 = sphi 0, %s45
    %s46 = sphi 0, %s43
    %s47 = sphi 0, %s46
    %s63 = sphi 0, %s47
    %s69 = sphi 0, %s71
    %s72 = sphi 0, %s69
    %s73 = sphi 0, %s72
    %s89 = sphi 0, %s73
    %s93 = sphi 0, %s93
    %s95 = sphi 0, %s93
    %s96 = sphi 0, %s95
    %s110 = sphi 0, %s96
    %s114 = sphi 0, %s114
    %s116 = sphi 0, %s114
    %s117 = sphi 0, %s116
    %s131 = sphi 0, %s117
    %s135 = sphi 0, %s135
    %s137 = sphi 0, %s135
    %s138 = sphi 0, %s137
    %s152 = sphi 0, %s138
    %s156 = sphi 0, %s156
    %s158 = sphi 0, %s156
    %s159 = sphi 0, %s158
    %s173 = sphi 0, %s159
    %s181 = sphi 0, %s183
    %s184 = sphi 0, %s181
    %s185 = sphi 0, %s184
    %s201 = sphi 0, %s185
  $region4: #{tpu_custom_call.1} parent=0 // loop_header_branch
    %15 = sbr.rel (%p13) target = $region8
  $region5: #{tpu_custom_call.1} parent=0 // loop_body
    %s17 = ssub.s32 %s12, 1
    %s18 = ssub.s32 %s12, 2
    %s28 = sadd.s32 1, %s21
    %p29 = scmp.ge.s32.totalorder %s28, 1
    %s30 = scalar_select %p29, 0, %s28
    %s31 = sadd.s32 1, %s20
    %s32 = scalar_select %p29, %s31, %s20
    %p33 = scmp.ge.s32.totalorder %s32, 2
    %s34 = scalar_select %p33, 0, %s32
    %s35 = sadd.s32 1, %s19
    %s36 = scalar_select %p33, %s35, %s19
    %p37 = scmp.ge.s32.totalorder %s36, 2
    %s38 = scalar_select %p37, 0, %s36
    %s39 = ssub.s32 %s19, %s38
    %s40 = ssub.s32 %s21, %s30
    %s41 = sor.u32 %s39, %s40
    %p42 = scmp.eq.s32.totalorder %s41, 0
    %s44 = sadd.s32 %s43, 1
    %s45 = scalar_select %p42, %s43, %s44
    %p48 = pneg %p42
    %p49 = scmp.eq.s32.totalorder %s12, 3
    %p50 = por %p48, %p49
    %p51 = scmp.ne.s32.totalorder %s43, %s46
    %p52 = scmp.eq.s32.totalorder %s12, 0
    %p53 = por %p51, %p52
    %p54 = scmp.ne.s32.totalorder %s43, %s46
    %p55 = scmp.eq.s32.totalorder %s17, 3
    %p56 = por %p54, %p55
    %p57 = scmp.ne.s32.totalorder %s46, %s47
    %p58 = scmp.eq.s32.totalorder %s17, 0
    %p59 = por %p57, %p58
    %p60 = scmp.ne.s32.totalorder %s46, %s47
    %p61 = scmp.eq.s32.totalorder %s18, 3
    %p62 = por %p60, %p61
    %p64 = scmp.ne.s32.totalorder %s47, %s63
    %p65 = scmp.eq.s32.totalorder %s18, 0
    %p66 = por %p64, %p65
    %s67 = ssub.s32 %s21, %s30
    %p68 = scmp.eq.s32.totalorder %s67, 0
    %s70 = sadd.s32 %s69, 1
    %s71 = scalar_select %p68, %s69, %s70
    %p74 = pneg %p68
    %p75 = scmp.eq.s32.totalorder %s12, 3
    %p76 = por %p74, %p75
    %p77 = scmp.ne.s32.totalorder %s69, %s72
    %p78 = scmp.eq.s32.totalorder %s12, 0
    %p79 = por %p77, %p78
    %p80 = scmp.ne.s32.totalorder %s69, %s72
    %p81 = scmp.eq.s32.totalorder %s17, 3
    %p82 = por %p80, %p81
    %p83 = scmp.ne.s32.totalorder %s72, %s73
    %p84 = scmp.eq.s32.totalorder %s17, 0
    %p85 = por %p83, %p84
    %p86 = scmp.ne.s32.totalorder %s72, %s73
    %p87 = scmp.eq.s32.totalorder %s18, 3
    %p88 = por %p86, %p87
    %p90 = scmp.ne.s32.totalorder %s73, %s89
    %p91 = scmp.eq.s32.totalorder %s18, 0
    %p92 = por %p90, %p91
    %s94 = sadd.s32 %s93, 1
    %p97 = scmp.eq.s32.totalorder %s12, 3
    %p98 = scmp.ne.s32.totalorder %s93, %s95
    %p99 = scmp.eq.s32.totalorder %s12, 0
    %p100 = por %p98, %p99
    %p101 = scmp.ne.s32.totalorder %s93, %s95
    %p102 = scmp.eq.s32.totalorder %s17, 3
    %p103 = por %p101, %p102
    %p104 = scmp.ne.s32.totalorder %s95, %s96
    %p105 = scmp.eq.s32.totalorder %s17, 0
    %p106 = por %p104, %p105
    %p107 = scmp.ne.s32.totalorder %s95, %s96
    %p108 = scmp.eq.s32.totalorder %s18, 3
    %p109 = por %p107, %p108
    %p111 = scmp.ne.s32.totalorder %s96, %s110
    %p112 = scmp.eq.s32.totalorder %s18, 0
    %p113 = por %p111, %p112
    %s115 = sadd.s32 %s114, 1
    %p118 = scmp.eq.s32.totalorder %s12, 3
    %p119 = scmp.ne.s32.totalorder %s114, %s116
    %p120 = scmp.eq.s32.totalorder %s12, 0
    %p121 = por %p119, %p120
    %p122 = scmp.ne.s32.totalorder %s114, %s116
    %p123 = scmp.eq.s32.totalorder %s17, 3
    %p124 = por %p122, %p123
    %p125 = scmp.ne.s32.totalorder %s116, %s117
    %p126 = scmp.eq.s32.totalorder %s17, 0
    %p127 = por %p125, %p126
    %p128 = scmp.ne.s32.totalorder %s116, %s117
    %p129 = scmp.eq.s32.totalorder %s18, 3
    %p130 = por %p128, %p129
    %p132 = scmp.ne.s32.totalorder %s117, %s131
    %p133 = scmp.eq.s32.totalorder %s18, 0
    %p134 = por %p132, %p133
    %s136 = sadd.s32 %s135, 1
    %p139 = scmp.eq.s32.totalorder %s12, 3
    %p140 = scmp.ne.s32.totalorder %s135, %s137
    %p141 = scmp.eq.s32.totalorder %s12, 0
    %p142 = por %p140, %p141
    %p143 = scmp.ne.s32.totalorder %s135, %s137
    %p144 = scmp.eq.s32.totalorder %s17, 3
    %p145 = por %p143, %p144
    %p146 = scmp.ne.s32.totalorder %s137, %s138
    %p147 = scmp.eq.s32.totalorder %s17, 0
    %p148 = por %p146, %p147
    %p149 = scmp.ne.s32.totalorder %s137, %s138
    %p150 = scmp.eq.s32.totalorder %s18, 3
    %p151 = por %p149, %p150
    %p153 = scmp.ne.s32.totalorder %s138, %s152
    %p154 = scmp.eq.s32.totalorder %s18, 0
    %p155 = por %p153, %p154
    %s157 = sadd.s32 %s156, 1
    %p160 = scmp.eq.s32.totalorder %s12, 3
    %p161 = scmp.ne.s32.totalorder %s156, %s158
    %p162 = scmp.eq.s32.totalorder %s12, 0
    %p163 = por %p161, %p162
    %p164 = scmp.ne.s32.totalorder %s156, %s158
    %p165 = scmp.eq.s32.totalorder %s17, 3
    %p166 = por %p164, %p165
    %p167 = scmp.ne.s32.totalorder %s158, %s159
    %p168 = scmp.eq.s32.totalorder %s17, 0
    %p169 = por %p167, %p168
    %p170 = scmp.ne.s32.totalorder %s158, %s159
    %p171 = scmp.eq.s32.totalorder %s18, 3
    %p172 = por %p170, %p171
    %p174 = scmp.ne.s32.totalorder %s159, %s173
    %p175 = scmp.eq.s32.totalorder %s18, 0
    %p176 = por %p174, %p175
    %s177 = ssub.s32 %s19, %s38
    %s178 = ssub.s32 %s20, %s34
    %s179 = sor.u32 %s177, %s178
    %p180 = scmp.eq.s32.totalorder %s179, 0
    %s182 = sadd.s32 %s181, 1
    %s183 = scalar_select %p180, %s181, %s182
    %p186 = pneg %p180
    %p187 = scmp.eq.s32.totalorder %s12, 3
    %p188 = por %p186, %p187
    %p189 = scmp.ne.s32.totalorder %s181, %s184
    %p190 = scmp.eq.s32.totalorder %s12, 0
    %p191 = por %p189, %p190
    %p192 = scmp.ne.s32.totalorder %s181, %s184
    %p193 = scmp.eq.s32.totalorder %s17, 3
    %p194 = por %p192, %p193
    %p195 = scmp.ne.s32.totalorder %s184, %s185
    %p196 = scmp.eq.s32.totalorder %s17, 0
    %p197 = por %p195, %p196
    %p198 = scmp.ne.s32.totalorder %s184, %s185
    %p199 = scmp.eq.s32.totalorder %s18, 3
    %p200 = por %p198, %p199
    %p202 = scmp.ne.s32.totalorder %s185, %s201
    %p203 = scmp.eq.s32.totalorder %s18, 0
    %p204 = por %p202, %p203
    %p205 = scmp.le.s32.totalorder 1, %s12
    %p206 = scmp.lt.s32.totalorder %s12, 5
    %p207 = pnand %p205, %p206
    %p208 = pneg %p207
    // Predicated region
    $region9: #{tpu_custom_call.1} parent=5 // pred_check
      _
    $region10: #{tpu_custom_call.1} parent=5 // pred_check_branch
      %210 = sbr.rel (%p207) target = $region12
    $region11: #{tpu_custom_call.1} parent=5 // pred_region
      %s211 = ssub.s32 %s12, 1
      // Predicated region
      $region13: #{tpu_custom_call.1} parent=11 // pred_check
        %p212 = pneg %p85
      $region14: #{tpu_custom_call.1} parent=11 // pred_check_branch
        %214 = sbr.rel (%p212) target = $region16
      $region15: #{tpu_custom_call.1} parent=11 // pred_region
        %s215 = smul.u32 16, %s24
        %p216 = scmp.lt.s32.totalorder %s215, 15
        %s217 = scalar_select %p216, %s215, 15
        %s218 = smul.addr %s217, 4
        %s219 = scalar_lea.vmem %s1, %s218
        %s220 = smul.u32 16, %s24
      $region16: #{tpu_custom_call.1} parent=11 // pred_fallthru
        _
      // Predicated region
      $region17: #{tpu_custom_call.1} parent=11 // pred_check
        %p221 = pneg %p106
      $region18: #{tpu_custom_call.1} parent=11 // pred_check_branch
        %223 = sbr.rel (%p221) target = $region20
      $region19: #{tpu_custom_call.1} parent=11 // pred_region
        _
      $region20: #{tpu_custom_call.1} parent=11 // pred_fallthru
        _
      // Predicated region
      $region21: #{tpu_custom_call.1} parent=11 // pred_check
        %p224 = pneg %p127
      $region22: #{tpu_custom_call.1} parent=11 // pred_check_branch
        %226 = sbr.rel (%p224) target = $region24
      $region23: #{tpu_custom_call.1} parent=11 // pred_region
        _
      $region24: #{tpu_custom_call.1} parent=11 // pred_fallthru
        _
      // Predicated region
      $region25: #{tpu_custom_call.1} parent=11 // pred_check
        %p227 = pneg %p148
      $region26: #{tpu_custom_call.1} parent=11 // pred_check_branch
        %229 = sbr.rel (%p227) target = $region28
      $region27: #{tpu_custom_call.1} parent=11 // pred_region
        _
      $region28: #{tpu_custom_call.1} parent=11 // pred_fallthru
        _
      // Predicated region
      $region29: #{tpu_custom_call.1} parent=11 // pred_check
        %p230 = pneg %p169
      $region30: #{tpu_custom_call.1} parent=11 // pred_check_branch
        %232 = sbr.rel (%p230) target = $region32
      $region31: #{tpu_custom_call.1} parent=11 // pred_region
        _
      $region32: #{tpu_custom_call.1} parent=11 // pred_fallthru
        _
    $region12: #{tpu_custom_call.1} parent=5 // pred_fallthru
      _
    %p233 = scmp.lt.s32.totalorder %s12, 4
    // Predicated region
    $region33: #{tpu_custom_call.1} parent=5 // pred_check
      %p234 = pneg %p233
    $region34: #{tpu_custom_call.1} parent=5 // pred_check_branch
      %236 = sbr.rel (%p234) target = $region36
    $region35: #{tpu_custom_call.1} parent=5 // pred_region
      // Predicated region
      $region37: #{tpu_custom_call.1} parent=35 // pred_check
        %p237 = pneg %p53
      $region38: #{tpu_custom_call.1} parent=35 // pred_check_branch
        %239 = sbr.rel (%p237) target = $region40
      $region39: #{tpu_custom_call.1} parent=35 // pred_region
        %p240 = scmp.lt.s32.totalorder %s19, 1
        %s241 = scalar_select %p240, %s19, 1
        %p242 = scmp.lt.s32.totalorder %s21, 0
        %s243 = scalar_select %p242, %s21, 0
        %s244 = smul.addr %s241, 54
        %s245 = sadd.s32 %s243, %s244
        %s246 = smul.addr %s245, 4
        %s247 = scalar_lea.vmem %s0, %s246
      $region40: #{tpu_custom_call.1} parent=35 // pred_fallthru
        _
    $region36: #{tpu_custom_call.1} parent=5 // pred_fallthru
      _
    %p248 = scmp.le.s32.totalorder 1, %s12
    %p249 = scmp.lt.s32.totalorder %s12, 5
    %p250 = pnand %p248, %p249
    %p251 = pneg %p250
    // Predicated region
    $region41: #{tpu_custom_call.1} parent=5 // pred_check
      _
    $region42: #{tpu_custom_call.1} parent=5 // pred_check_branch
      %253 = sbr.rel (%p250) target = $region44
    $region43: #{tpu_custom_call.1} parent=5 // pred_region
      %s254 = ssub.s32 %s12, 1
      %p255 = scmp.lt.s32.totalorder %s22, 1
      %s256 = scalar_select %p255, %s22, 1
      %p257 = scmp.lt.s32.totalorder %s24, 0
      %s258 = scalar_select %p257, %s24, 0
      %s259 = smul.addr %s256, 54
      %s260 = sadd.s32 %s258, %s259
      %s261 = smul.addr %s260, 4
      %s262 = scalar_lea.vmem %s0, %s261
      %p263 = pneg %p59
      %p264 = pneg %p56
      %s265 = smul.u32 16, %s24
      %p266 = scmp.lt.s32.totalorder %s265, 15
      %s267 = scalar_select %p266, %s265, 15
      %s268 = smul.addr %s267, 4
      %s269 = scalar_lea.vmem %s1, %s268
      %p270 = pneg %p85
      %p271 = pneg %p82
      %p272 = pneg %p106
      %p273 = pneg %p103
      %p274 = pneg %p127
      %p275 = pneg %p124
      %p276 = pneg %p148
      %p277 = pneg %p145
      %p278 = pneg %p169
      %p279 = pneg %p166
      %p280 = pneg %p197
      %p281 = pneg %p194
      %s282 = smul.u32 8, %s23
      %p283 = scmp.lt.s32.totalorder %s22, 1
      %s284 = scalar_select %p283, %s22, 1
      %p285 = scmp.lt.s32.totalorder %s282, 15
      %s286 = scalar_select %p285, %s282, 15
      %s287 = smul.addr %s286, 2
      %s288 = smul.addr %s284, 32
      %s289 = sadd.s32 %s287, %s288
      %s290 = smul.addr %s289, 8
      %s291 = scalar_lea.vmem %s6, %s290
      %p292 = scmp.lt.s32.totalorder %s22, 1
      %s293 = scalar_select %p292, %s22, 1
      %p294 = scmp.lt.s32.totalorder %s24, 0
      %s295 = scalar_select %p294, %s24, 0
      %s296 = smul.addr %s293, 54
      %s297 = sadd.s32 %s295, %s296
      %s298 = smul.addr %s297, 4
      %s299 = scalar_lea.vmem %s0, %s298
      %s300 = smul.u32 16, %s24
      %p301 = scmp.lt.s32.totalorder %s300, 15
      %s302 = scalar_select %p301, %s300, 15
      %s303 = smul.addr %s302, 4
      %s304 = scalar_lea.vmem %s1, %s303
      %s305 = smul.u32 16, %s24
      %s306 = smul.u32 8, %s23
      %p307 = scmp.lt.s32.totalorder %s22, 1
      %s308 = scalar_select %p307, %s22, 1
      %p309 = scmp.lt.s32.totalorder %s306, 15
      %s310 = scalar_select %p309, %s306, 15
      %s311 = smul.addr %s310, 2
      %s312 = smul.addr %s308, 32
      %s313 = sadd.s32 %s311, %s312
      %s314 = smul.addr %s313, 8
      %s315 = scalar_lea.vmem %s6, %s314
      %s316 = smul.u32 8, %s23
      %s318 = smul.u32 %s23, 8
      %p319 = scmp.eq.s32.totalorder %s24, 0
      // Predicated region
      $region45: #{tpu_custom_call.1} parent=43 // pred_check
        %p320 = pneg %p319
      $region46: #{tpu_custom_call.1} parent=43 // pred_check_branch
        %322 = sbr.rel (%p320) target = $region48
      $region47: #{tpu_custom_call.1} parent=43 // pred_region
        %vm323 = vcmask 523264
        %324 = vst.msk [vmem:[#allocation2] sm:$0xff] %vm323, 0.0
        %325 = vst.msk [vmem:[#allocation2 + $0x8] sm:$0xff] %vm323, 0.0
        %326 = vst.msk [vmem:[#allocation2 + $0x10] sm:$0xff] %vm323, 0.0
        %327 = vst.msk [vmem:[#allocation2 + $0x18] sm:$0xff] %vm323, 0.0
        %328 = vst.msk [vmem:[#allocation2 + $0x20] sm:$0xff] %vm323, 0.0
        %329 = vst.msk [vmem:[#allocation2 + $0x28] sm:$0xff] %vm323, 0.0
        %330 = vst.msk [vmem:[#allocation2 + $0x30] sm:$0xff] %vm323, 0.0
        %331 = vst.msk [vmem:[#allocation2 + $0x38] sm:$0xff] %vm323, 0.0
        %332 = vst.msk [vmem:[#allocation2 + $0x40] sm:$0xff] %vm323, 0.0
        %333 = vst.msk [vmem:[#allocation2 + $0x48] sm:$0xff] %vm323, 0.0
        %334 = vst.msk [vmem:[#allocation2 + $0x50] sm:$0xff] %vm323, 0.0
        %335 = vst.msk [vmem:[#allocation2 + $0x58] sm:$0xff] %vm323, 0.0
        %336 = vst.msk [vmem:[#allocation2 + $0x60] sm:$0xff] %vm323, 0.0
        %337 = vst.msk [vmem:[#allocation2 + $0x68] sm:$0xff] %vm323, 0.0
        %338 = vst.msk [vmem:[#allocation2 + $0x70] sm:$0xff] %vm323, 0.0
        %339 = vst.msk [vmem:[#allocation2 + $0x78] sm:$0xff] %vm323, 0.0
      $region48: #{tpu_custom_call.1} parent=43 // pred_fallthru
        _
      %s340 = smul.u32 %s318, 3
      %s341 = smul.addr %s340, 4
      %s342 = scalar_lea.vmem %s299, %s341
      %v343 = vld [vmem:[%s342] sm:$0xf]
      %v344 = vld [vmem:[%s342 + $0x4] sm:$0xf]
      %v345 = vld [vmem:[%s342 + $0x8] sm:$0x1]
      %v346 = vld [vmem:[%s342 + $0xc] sm:$0xf]
      %v347 = vld [vmem:[%s342 + $0x10] sm:$0xf]
      %v348 = vld [vmem:[%s342 + $0x14] sm:$0x1]
      %v349 = vld [vmem:[%s342 + $0x18] sm:$0xf]
      %v350 = vld [vmem:[%s342 + $0x1c] sm:$0xf]
      %v351 = vld [vmem:[%s342 + $0x20] sm:$0x1]
      %v352 = vld [vmem:[%s342 + $0x24] sm:$0xf]
      %v353 = vld [vmem:[%s342 + $0x28] sm:$0xf]
      %v354 = vld [vmem:[%s342 + $0x2c] sm:$0x1]
      %v355 = vld [vmem:[%s342 + $0x30] sm:$0xf]
      %v356 = vld [vmem:[%s342 + $0x34] sm:$0xf]
      %v357 = vld [vmem:[%s342 + $0x38] sm:$0x1]
      %v358 = vld [vmem:[%s342 + $0x3c] sm:$0xf]
      %v359 = vld [vmem:[%s342 + $0x40] sm:$0xf]
      %v360 = vld [vmem:[%s342 + $0x44] sm:$0x1]
      %v361 = vld [vmem:[%s342 + $0x48] sm:$0xf]
      %v362 = vld [vmem:[%s342 + $0x4c] sm:$0xf]
      %v363 = vld [vmem:[%s342 + $0x50] sm:$0x1]
      %v364 = vld [vmem:[%s342 + $0x54] sm:$0xf]
      %v365 = vld [vmem:[%s342 + $0x58] sm:$0xf]
      %v366 = vld [vmem:[%s342 + $0x5c] sm:$0x1]
      %v367 = vld [vmem:[%s342 + $0x60] sm:$0xf]
      %v368 = vld [vmem:[%s342 + $0x64] sm:$0xf]
      %v369 = vld [vmem:[%s342 + $0x68] sm:$0x1]
      %v370 = vld [vmem:[%s342 + $0x6c] sm:$0xf]
      %v371 = vld [vmem:[%s342 + $0x70] sm:$0xf]
      %v372 = vld [vmem:[%s342 + $0x74] sm:$0x1]
      %vm373 = vsmask.f32 3328
      %vm374 = vsmask.f32 7440
      %vm375 = vmor %vm373, %vm374
      %v377 = vshrl.u32 %v343, 16
      %v379 = vrot.slane %v377, 4
      %v380 = vshll.u32 %v343, 16
      %v382 = vrot.slane %v380, 5
      %v383 = vor.u32 %v379, %v382
      %v384 = vrot.slane %v383, 4
      %v386 = vshll.u32 %v344, 16
      %v388 = vrot.slane %v386, 5
      %v389 = vsel %vm375, %v384, %v388
      %v390 = vshrl.u32 %v344, 16
      %v392 = vrot.slane %v390, 4
      %v393 = vor.u32 %v392, %v388
      %v394 = vrot.slane %v393, 4
      %v396 = vshll.u32 %v345, 16
      %v398 = vrot.slane %v396, 5
      %v399 = vsel %vm375, %v394, %v398
      %v401 = vshrl.u32 %v346, 16
      %v403 = vrot.slane %v401, 4
      %v404 = vshll.u32 %v346, 16
      %v406 = vrot.slane %v404, 5
      %v407 = vor.u32 %v403, %v406
      %v408 = vrot.slane %v407, 4
      %v410 = vshll.u32 %v347, 16
      %v412 = vrot.slane %v410, 5
      %v413 = vsel %vm375, %v408, %v412
      %v414 = vshrl.u32 %v347, 16
      %v416 = vrot.slane %v414, 4
      %v417 = vor.u32 %v416, %v412
      %v418 = vrot.slane %v417, 4
      %v420 = vshll.u32 %v348, 16
      %v422 = vrot.slane %v420, 5
      %v423 = vsel %vm375, %v418, %v422
      %v425 = vshrl.u32 %v349, 16
      %v427 = vrot.slane %v425, 4
      %v428 = vshll.u32 %v349, 16
      %v430 = vrot.slane %v428, 5
      %v431 = vor.u32 %v427, %v430
      %v432 = vrot.slane %v431, 4
      %v434 = vshll.u32 %v350, 16
      %v436 = vrot.slane %v434, 5
      %v437 = vsel %vm375, %v432, %v436
      %v438 = vshrl.u32 %v350, 16
      %v440 = vrot.slane %v438, 4
      %v441 = vor.u32 %v440, %v436
      %v442 = vrot.slane %v441, 4
      %v444 = vshll.u32 %v351, 16
      %v446 = vrot.slane %v444, 5
      %v447 = vsel %vm375, %v442, %v446
      %v449 = vshrl.u32 %v352, 16
      %v451 = vrot.slane %v449, 4
      %v452 = vshll.u32 %v352, 16
      %v454 = vrot.slane %v452, 5
      %v455 = vor.u32 %v451, %v454
      %v456 = vrot.slane %v455, 4
      %v458 = vshll.u32 %v353, 16
      %v460 = vrot.slane %v458, 5
      %v461 = vsel %vm375, %v456, %v460
      %v462 = vshrl.u32 %v353, 16
      %v464 = vrot.slane %v462, 4
      %v465 = vor.u32 %v464, %v460
      %v466 = vrot.slane %v465, 4
      %v468 = vshll.u32 %v354, 16
      %v470 = vrot.slane %v468, 5
      %v471 = vsel %vm375, %v466, %v470
      %v473 = vshrl.u32 %v355, 16
      %v475 = vrot.slane %v473, 4
      %v476 = vshll.u32 %v355, 16
      %v478 = vrot.slane %v476, 5
      %v479 = vor.u32 %v475, %v478
      %v480 = vrot.slane %v479, 4
      %v482 = vshll.u32 %v356, 16
      %v484 = vrot.slane %v482, 5
      %v485 = vsel %vm375, %v480, %v484
      %v486 = vshrl.u32 %v356, 16
      %v488 = vrot.slane %v486, 4
      %v489 = vor.u32 %v488, %v484
      %v490 = vrot.slane %v489, 4
      %v492 = vshll.u32 %v357, 16
      %v494 = vrot.slane %v492, 5
      %v495 = vsel %vm375, %v490, %v494
      %v497 = vshrl.u32 %v358, 16
      %v499 = vrot.slane %v497, 4
      %v500 = vshll.u32 %v358, 16
      %v502 = vrot.slane %v500, 5
      %v503 = vor.u32 %v499, %v502
      %v504 = vrot.slane %v503, 4
      %v506 = vshll.u32 %v359, 16
      %v508 = vrot.slane %v506, 5
      %v509 = vsel %vm375, %v504, %v508
      %v510 = vshrl.u32 %v359, 16
      %v512 = vrot.slane %v510, 4
      %v513 = vor.u32 %v512, %v508
      %v514 = vrot.slane %v513, 4
      %v516 = vshll.u32 %v360, 16
      %v518 = vrot.slane %v516, 5
      %v519 = vsel %vm375, %v514, %v518
      %v521 = vshrl.u32 %v361, 16
      %v523 = vrot.slane %v521, 4
      %v524 = vshll.u32 %v361, 16
      %v526 = vrot.slane %v524, 5
      %v527 = vor.u32 %v523, %v526
      %v528 = vrot.slane %v527, 4
      %v530 = vshll.u32 %v362, 16
      %v532 = vrot.slane %v530, 5
      %v533 = vsel %vm375, %v528, %v532
      %v534 = vshrl.u32 %v362, 16
      %v536 = vrot.slane %v534, 4
      %v537 = vor.u32 %v536, %v532
      %v538 = vrot.slane %v537, 4
      %v540 = vshll.u32 %v363, 16
      %v542 = vrot.slane %v540, 5
      %v543 = vsel %vm375, %v538, %v542
      %v545 = vshrl.u32 %v364, 16
      %v547 = vrot.slane %v545, 4
      %v548 = vshll.u32 %v364, 16
      %v550 = vrot.slane %v548, 5
      %v551 = vor.u32 %v547, %v550
      %v552 = vrot.slane %v551, 4
      %v554 = vshll.u32 %v365, 16
      %v556 = vrot.slane %v554, 5
      %v557 = vsel %vm375, %v552, %v556
      %v558 = vshrl.u32 %v365, 16
      %v560 = vrot.slane %v558, 4
      %v561 = vor.u32 %v560, %v556
      %v562 = vrot.slane %v561, 4
      %v564 = vshll.u32 %v366, 16
      %v566 = vrot.slane %v564, 5
      %v567 = vsel %vm375, %v562, %v566
      %v569 = vshrl.u32 %v367, 16
      %v571 = vrot.slane %v569, 4
      %v572 = vshll.u32 %v367, 16
      %v574 = vrot.slane %v572, 5
      %v575 = vor.u32 %v571, %v574
      %v576 = vrot.slane %v575, 4
      %v578 = vshll.u32 %v368, 16
      %v580 = vrot.slane %v578, 5
      %v581 = vsel %vm375, %v576, %v580
      %v582 = vshrl.u32 %v368, 16
      %v584 = vrot.slane %v582, 4
      %v585 = vor.u32 %v584, %v580
      %v586 = vrot.slane %v585, 4
      %v588 = vshll.u32 %v369, 16
      %v590 = vrot.slane %v588, 5
      %v591 = vsel %vm375, %v586, %v590
      %v593 = vshrl.u32 %v370, 16
      %v595 = vrot.slane %v593, 4
      %v596 = vshll.u32 %v370, 16
      %v598 = vrot.slane %v596, 5
      %v599 = vor.u32 %v595, %v598
      %v600 = vrot.slane %v599, 4
      %v602 = vshll.u32 %v371, 16
      %v604 = vrot.slane %v602, 5
      %v605 = vsel %vm375, %v600, %v604
      %v606 = vshrl.u32 %v371, 16
      %v608 = vrot.slane %v606, 4
      %v609 = vor.u32 %v608, %v604
      %v610 = vrot.slane %v609, 4
      %v612 = vshll.u32 %v372, 16
      %v614 = vrot.slane %v612, 5
      %v615 = vsel %vm375, %v610, %v614
      %vm646 = vcmask 1042432
      %vm647 = vcmask 1046532
      %vm648 = vmor %vm646, %vm647
      %v649 = vrot.slane %v343, 5
      %v650 = vrot.slane %v649, 4
      %v651 = vrot.slane %v344, 5
      %v652 = vsel %vm648, %v650, %v651
      %v653 = vrot.slane %v651, 4
      %v654 = vrot.slane %v345, 5
      %v655 = vsel %vm648, %v653, %v654
      %v656 = vrot.slane %v346, 5
      %v657 = vrot.slane %v656, 4
      %v658 = vrot.slane %v347, 5
      %v659 = vsel %vm648, %v657, %v658
      %v660 = vrot.slane %v658, 4
      %v661 = vrot.slane %v348, 5
      %v662 = vsel %vm648, %v660, %v661
      %v663 = vrot.slane %v349, 5
      %v664 = vrot.slane %v663, 4
      %v665 = vrot.slane %v350, 5
      %v666 = vsel %vm648, %v664, %v665
      %v667 = vrot.slane %v665, 4
      %v668 = vrot.slane %v351, 5
      %v669 = vsel %vm648, %v667, %v668
      %v670 = vrot.slane %v352, 5
      %v671 = vrot.slane %v670, 4
      %v672 = vrot.slane %v353, 5
      %v673 = vsel %vm648, %v671, %v672
      %v674 = vrot.slane %v672, 4
      %v675 = vrot.slane %v354, 5
      %v676 = vsel %vm648, %v674, %v675
      %v677 = vrot.slane %v355, 5
      %v678 = vrot.slane %v677, 4
      %v679 = vrot.slane %v356, 5
      %v680 = vsel %vm648, %v678, %v679
      %v681 = vrot.slane %v679, 4
      %v682 = vrot.slane %v357, 5
      %v683 = vsel %vm648, %v681, %v682
      %v684 = vrot.slane %v358, 5
      %v685 = vrot.slane %v684, 4
      %v686 = vrot.slane %v359, 5
      %v687 = vsel %vm648, %v685, %v686
      %v688 = vrot.slane %v686, 4
      %v689 = vrot.slane %v360, 5
      %v690 = vsel %vm648, %v688, %v689
      %v691 = vrot.slane %v361, 5
      %v692 = vrot.slane %v691, 4
      %v693 = vrot.slane %v362, 5
      %v694 = vsel %vm648, %v692, %v693
      %v695 = vrot.slane %v693, 4
      %v696 = vrot.slane %v363, 5
      %v697 = vsel %vm648, %v695, %v696
      %v698 = vrot.slane %v364, 5
      %v699 = vrot.slane %v698, 4
      %v700 = vrot.slane %v365, 5
      %v701 = vsel %vm648, %v699, %v700
      %v702 = vrot.slane %v700, 4
      %v703 = vrot.slane %v366, 5
      %v704 = vsel %vm648, %v702, %v703
      %v705 = vrot.slane %v367, 5
      %v706 = vrot.slane %v705, 4
      %v707 = vrot.slane %v368, 5
      %v708 = vsel %vm648, %v706, %v707
      %v709 = vrot.slane %v707, 4
      %v710 = vrot.slane %v369, 5
      %v711 = vsel %vm648, %v709, %v710
      %v712 = vrot.slane %v370, 5
      %v713 = vrot.slane %v712, 4
      %v714 = vrot.slane %v371, 5
      %v715 = vsel %vm648, %v713, %v714
      %v716 = vrot.slane %v714, 4
      %v717 = vrot.slane %v372, 5
      %v718 = vsel %vm648, %v716, %v717
      %v719 = vld [vmem:[%s304] sm:$0xf]
      %v720 = vld [vmem:[%s304 + $0x4] sm:$0xf]
      %v721 = vld [vmem:[%s304 + $0x8] sm:$0xf]
      %v722 = vld [vmem:[%s304 + $0xc] sm:$0xf]
      %v723 = vld [vmem:[%s304 + $0x10] sm:$0xf]
      %v724 = vld [vmem:[%s304 + $0x14] sm:$0xf]
      %v725 = vld [vmem:[%s304 + $0x18] sm:$0xf]
      %v726 = vld [vmem:[%s304 + $0x1c] sm:$0xf]
      %v727 = vld [vmem:[%s304 + $0x20] sm:$0xf]
      %v728 = vld [vmem:[%s304 + $0x24] sm:$0xf]
      %v729 = vld [vmem:[%s304 + $0x28] sm:$0xf]
      %v730 = vld [vmem:[%s304 + $0x2c] sm:$0xf]
      %v731 = vld [vmem:[%s304 + $0x30] sm:$0xf]
      %v732 = vld [vmem:[%s304 + $0x34] sm:$0xf]
      %v733 = vld [vmem:[%s304 + $0x38] sm:$0xf]
      %v734 = vld [vmem:[%s304 + $0x3c] sm:$0xf]
      %s735 = scalar_lea.vmem %s304, 64
      %v736 = vld [vmem:[%s735] sm:$0xf]
      %v737 = vld [vmem:[%s735 + $0x4] sm:$0xf]
      %v738 = vld [vmem:[%s735 + $0x8] sm:$0xf]
      %v739 = vld [vmem:[%s735 + $0xc] sm:$0xf]
      %v740 = vld [vmem:[%s735 + $0x10] sm:$0xf]
      %v741 = vld [vmem:[%s735 + $0x14] sm:$0xf]
      %v742 = vld [vmem:[%s735 + $0x18] sm:$0xf]
      %v743 = vld [vmem:[%s735 + $0x1c] sm:$0xf]
      %v744 = vld [vmem:[%s735 + $0x20] sm:$0xf]
      %v745 = vld [vmem:[%s735 + $0x24] sm:$0xf]
      %v746 = vld [vmem:[%s735 + $0x28] sm:$0xf]
      %v747 = vld [vmem:[%s735 + $0x2c] sm:$0xf]
      %v748 = vld [vmem:[%s735 + $0x30] sm:$0xf]
      %v749 = vld [vmem:[%s735 + $0x34] sm:$0xf]
      %v750 = vld [vmem:[%s735 + $0x38] sm:$0xf]
      %v751 = vld [vmem:[%s735 + $0x3c] sm:$0xf]
      %v752 = vunpack.c.l.b16 %v389
      %v753 = vunpack.c.l.b16 %v399
      %v754 = vunpack.c.l.b16 %v413
      %v755 = vunpack.c.l.b16 %v423
      %v756 = vunpack.c.l.b16 %v437
      %v757 = vunpack.c.l.b16 %v447
      %v758 = vunpack.c.l.b16 %v461
      %v759 = vunpack.c.l.b16 %v471
      %v760 = vunpack.c.l.b16 %v485
      %v761 = vunpack.c.l.b16 %v495
      %v762 = vunpack.c.l.b16 %v509
      %v763 = vunpack.c.l.b16 %v519
      %v764 = vunpack.c.l.b16 %v533
      %v765 = vunpack.c.l.b16 %v543
      %v766 = vunpack.c.l.b16 %v557
      %v767 = vunpack.c.l.b16 %v567
      %v768 = vpack.c.b16 %v753, %v752
      %v769 = vpack.c.b16 %v755, %v754
      %v770 = vpack.c.b16 %v757, %v756
      %v771 = vpack.c.b16 %v759, %v758
      %v772 = vpack.c.b16 %v761, %v760
      %v773 = vpack.c.b16 %v763, %v762
      %v774 = vpack.c.b16 %v765, %v764
      %v775 = vpack.c.b16 %v767, %v766
      %v800 = vunpack.c.l.b16 %v736
      %v801 = vunpack.c.l.b16 %v737
      %v802 = vunpack.c.l.b16 %v738
      %v803 = vunpack.c.l.b16 %v739
      %v804 = vunpack.c.l.b16 %v740
      %v805 = vunpack.c.l.b16 %v741
      %v806 = vunpack.c.l.b16 %v742
      %v807 = vunpack.c.l.b16 %v743
      %v808 = vunpack.c.l.b16 %v744
      %v809 = vunpack.c.l.b16 %v745
      %v810 = vunpack.c.l.b16 %v746
      %v811 = vunpack.c.l.b16 %v747
      %v812 = vunpack.c.l.b16 %v748
      %v813 = vunpack.c.l.b16 %v749
      %v814 = vunpack.c.l.b16 %v750
      %v815 = vunpack.c.l.b16 %v751
      %v816 = vpack.c.b16 %v801, %v800
      %v817 = vpack.c.b16 %v803, %v802
      %v818 = vpack.c.b16 %v805, %v804
      %v819 = vpack.c.b16 %v807, %v806
      %v820 = vpack.c.b16 %v809, %v808
      %v821 = vpack.c.b16 %v811, %v810
      %v822 = vpack.c.b16 %v813, %v812
      %v823 = vpack.c.b16 %v815, %v814
      %832 = vmatprep.subr.bf16.mxu0 0
      %833 = vmatpush1.bf16.msra.mxu0 %v816
      %834 = vmatprep.subr.bf16.mxu0 0
      %835 = vmatpush1.bf16.msra.mxu0 %v817
      %836 = vmatprep.subr.bf16.mxu0 0
      %837 = vmatpush1.bf16.msra.mxu0 %v818
      %838 = vmatprep.subr.bf16.mxu0 0
      %839 = vmatpush1.bf16.msra.mxu0 %v819
      %840 = vmatprep.subr.bf16.mxu0 0
      %841 = vmatpush1.bf16.msra.mxu0 %v820
      %842 = vmatprep.subr.bf16.mxu0 0
      %843 = vmatpush1.bf16.msra.mxu0 %v821
      %844 = vmatprep.subr.bf16.mxu0 0
      %845 = vmatpush1.bf16.msra.mxu0 %v822
      %846 = vmatprep.subr.bf16.mxu0 0
      %847 = vmatpush1.bf16.msra.mxu0 %v823
      %848 = vmatprep.subr.bf16.mxu0 0
      %849 = vmatpush1.bf16.msra.mxu0 0
      %850 = vmatprep.subr.bf16.mxu0 0
      %851 = vmatpush1.bf16.msra.mxu0 0
      %852 = vmatprep.subr.bf16.mxu0 0
      %853 = vmatpush1.bf16.msra.mxu0 0
      %854 = vmatprep.subr.bf16.mxu0 0
      %855 = vmatpush1.bf16.msra.mxu0 0
      %856 = vmatprep.subr.bf16.mxu0 0
      %857 = vmatpush1.bf16.msra.mxu0 0
      %858 = vmatprep.subr.bf16.mxu0 0
      %859 = vmatpush1.bf16.msra.mxu0 0
      %860 = vmatprep.subr.bf16.mxu0 0
      %861 = vmatpush1.bf16.msra.mxu0 0
      %862 = vmatprep.subr.bf16.mxu0 0
      %863 = vmatpush1.bf16.msra.mxu0 0
      %864 = vmatprep.mubr.bf16.mxu0 0
      %865 = vmatmul.mubr.bf16.gmra.mrb[0].mxu0 %v768
      %v866 = vpop.f32.mrb[0].mxu0
      %v867 = vadd.f32 0.0, %v866
      %v868 = vpop.f32.mrb[0].mxu0
      %v869 = vpop.f32.mrb[0].mxu0
      %v870 = vadd.f32 0.0, %v869
      %v871 = vpop.f32.mrb[0].mxu0
      %872 = vmatprep.mubr.bf16.mxu0 0
      %873 = vmatmul.mubr.bf16.gmra.mrb[0].mxu0 %v769
      %v874 = vpop.f32.mrb[0].mxu0
      %v875 = vadd.f32 0.0, %v874
      %v876 = vpop.f32.mrb[0].mxu0
      %v877 = vpop.f32.mrb[0].mxu0
      %v878 = vadd.f32 0.0, %v877
      %v879 = vpop.f32.mrb[0].mxu0
      %880 = vmatprep.mubr.bf16.mxu0 0
      %881 = vmatmul.mubr.bf16.gmra.mrb[0].mxu0 %v770
      %v882 = vpop.f32.mrb[0].mxu0
      %v883 = vadd.f32 0.0, %v882
      %v884 = vpop.f32.mrb[0].mxu0
      %v885 = vpop.f32.mrb[0].mxu0
      %v886 = vadd.f32 0.0, %v885
      %v887 = vpop.f32.mrb[0].mxu0
      %888 = vmatprep.mubr.bf16.mxu0 0
      %889 = vmatmul.mubr.bf16.gmra.mrb[0].mxu0 %v771
      %v890 = vpop.f32.mrb[0].mxu0
      %v891 = vadd.f32 0.0, %v890
      %v892 = vpop.f32.mrb[0].mxu0
      %v893 = vpop.f32.mrb[0].mxu0
      %v894 = vadd.f32 0.0, %v893
      %v895 = vpop.f32.mrb[0].mxu0
      %896 = vmatprep.mubr.bf16.mxu0 0
      %897 = vmatmul.mubr.bf16.gmra.mrb[0].mxu0 %v772
      %v898 = vpop.f32.mrb[0].mxu0
      %v899 = vadd.f32 0.0, %v898
      %v900 = vpop.f32.mrb[0].mxu0
      %v901 = vpop.f32.mrb[0].mxu0
      %v902 = vadd.f32 0.0, %v901
      %v903 = vpop.f32.mrb[0].mxu0
      %904 = vmatprep.mubr.bf16.mxu0 0
      %905 = vmatmul.mubr.bf16.gmra.mrb[0].mxu0 %v773
      %v906 = vpop.f32.mrb[0].mxu0
      %v907 = vadd.f32 0.0, %v906
      %v908 = vpop.f32.mrb[0].mxu0
      %v909 = vpop.f32.mrb[0].mxu0
      %v910 = vadd.f32 0.0, %v909
      %v911 = vpop.f32.mrb[0].mxu0
      %912 = vmatprep.mubr.bf16.mxu0 0
      %913 = vmatmul.mubr.bf16.gmra.mrb[0].mxu0 %v774
      %v914 = vpop.f32.mrb[0].mxu0
      %v915 = vadd.f32 0.0, %v914
      %v916 = vpop.f32.mrb[0].mxu0
      %v917 = vpop.f32.mrb[0].mxu0
      %v918 = vadd.f32 0.0, %v917
      %v919 = vpop.f32.mrb[0].mxu0
      %920 = vmatprep.mubr.bf16.mxu0 0
      %921 = vmatmul.mubr.bf16.gmra.mrb[0].mxu0 %v775
      %v922 = vpop.f32.mrb[0].mxu0
      %v923 = vadd.f32 0.0, %v922
      %v924 = vpop.f32.mrb[0].mxu0
      %v925 = vpop.f32.mrb[0].mxu0
      %v926 = vadd.f32 0.0, %v925
      %v927 = vpop.f32.mrb[0].mxu0
      %928 = vdwg.mxu0
      %v929 = vunpack.c.l.b16 %v343
      %v930 = vunpack.c.l.b16 %v344
      %v931 = vunpack.c.l.b16 %v346
      %v932 = vunpack.c.l.b16 %v347
      %v933 = vunpack.c.l.b16 %v349
      %v934 = vunpack.c.l.b16 %v350
      %v935 = vunpack.c.l.b16 %v352
      %v936 = vunpack.c.l.b16 %v353
      %v937 = vunpack.c.l.b16 %v355
      %v938 = vunpack.c.l.b16 %v356
      %v939 = vunpack.c.l.b16 %v358
      %v940 = vunpack.c.l.b16 %v359
      %v941 = vunpack.c.l.b16 %v361
      %v942 = vunpack.c.l.b16 %v362
      %v943 = vunpack.c.l.b16 %v364
      %v944 = vunpack.c.l.b16 %v365
      %v945 = vpack.c.b16 %v930, %v929
      %v946 = vpack.c.b16 %v932, %v931
      %v947 = vpack.c.b16 %v934, %v933
      %v948 = vpack.c.b16 %v936, %v935
      %v949 = vpack.c.b16 %v938, %v937
      %v950 = vpack.c.b16 %v940, %v939
      %v951 = vpack.c.b16 %v942, %v941
      %v952 = vpack.c.b16 %v944, %v943
      %v977 = vunpack.c.l.b16 %v719
      %v978 = vunpack.c.l.b16 %v720
      %v979 = vunpack.c.l.b16 %v721
      %v980 = vunpack.c.l.b16 %v722
      %v981 = vunpack.c.l.b16 %v723
      %v982 = vunpack.c.l.b16 %v724
      %v983 = vunpack.c.l.b16 %v725
      %v984 = vunpack.c.l.b16 %v726
      %v985 = vunpack.c.l.b16 %v727
      %v986 = vunpack.c.l.b16 %v728
      %v987 = vunpack.c.l.b16 %v729
      %v988 = vunpack.c.l.b16 %v730
      %v989 = vunpack.c.l.b16 %v731
      %v990 = vunpack.c.l.b16 %v732
      %v991 = vunpack.c.l.b16 %v733
      %v992 = vunpack.c.l.b16 %v734
      %v993 = vpack.c.b16 %v978, %v977
      %v994 = vpack.c.b16 %v980, %v979
      %v995 = vpack.c.b16 %v982, %v981
      %v996 = vpack.c.b16 %v984, %v983
      %v997 = vpack.c.b16 %v986, %v985
      %v998 = vpack.c.b16 %v988, %v987
      %v999 = vpack.c.b16 %v990, %v989
      %v1000 = vpack.c.b16 %v992, %v991
      %1009 = vmatprep.subr.bf16.mxu0 0
      %1010 = vmatpush1.bf16.msra.mxu0 %v993
      %1011 = vmatprep.subr.bf16.mxu0 0
      %1012 = vmatpush1.bf16.msra.mxu0 %v994
      %1013 = vmatprep.subr.bf16.mxu0 0
      %1014 = vmatpush1.bf16.msra.mxu0 %v995
      %1015 = vmatprep.subr.bf16.mxu0 0
      %1016 = vmatpush1.bf16.msra.mxu0 %v996
      %1017 = vmatprep.subr.bf16.mxu0 0
      %1018 = vmatpush1.bf16.msra.mxu0 %v997
      %1019 = vmatprep.subr.bf16.mxu0 0
      %1020 = vmatpush1.bf16.msra.mxu0 %v998
      %1021 = vmatprep.subr.bf16.mxu0 0
      %1022 = vmatpush1.bf16.msra.mxu0 %v999
      %1023 = vmatprep.subr.bf16.mxu0 0
      %1024 = vmatpush1.bf16.msra.mxu0 %v1000
      %1025 = vmatprep.subr.bf16.mxu0 0
      %1026 = vmatpush1.bf16.msra.mxu0 0
      %1027 = vmatprep.subr.bf16.mxu0 0
      %1028 = vmatpush1.bf16.msra.mxu0 0
      %1029 = vmatprep.subr.bf16.mxu0 0
      %1030 = vmatpush1.bf16.msra.mxu0 0
      %1031 = vmatprep.subr.bf16.mxu0 0
      %1032 = vmatpush1.bf16.msra.mxu0 0
      %1033 = vmatprep.subr.bf16.mxu0 0
      %1034 = vmatpush1.bf16.msra.mxu0 0
      %1035 = vmatprep.subr.bf16.mxu0 0
      %1036 = vmatpush1.bf16.msra.mxu0 0
      %1037 = vmatprep.subr.bf16.mxu0 0
      %1038 = vmatpush1.bf16.msra.mxu0 0
      %1039 = vmatprep.subr.bf16.mxu0 0
      %1040 = vmatpush1.bf16.msra.mxu0 0
      %1041 = vmatprep.mubr.bf16.mxu0 0
      %1042 = vmatmul.mubr.bf16.gmra.mrb[0].mxu0 %v945
      %v1043 = vpop.f32.mrb[0].mxu0
      %v1044 = vadd.f32 %v867, %v1043
      %v1045 = vpop.f32.mrb[0].mxu0
      %v1046 = vpop.f32.mrb[0].mxu0
      %v1047 = vadd.f32 %v870, %v1046
      %v1048 = vpop.f32.mrb[0].mxu0
      %1049 = vmatprep.mubr.bf16.mxu0 0
      %1050 = vmatmul.mubr.bf16.gmra.mrb[0].mxu0 %v946
      %v1051 = vpop.f32.mrb[0].mxu0
      %v1052 = vadd.f32 %v875, %v1051
      %v1053 = vpop.f32.mrb[0].mxu0
      %v1054 = vpop.f32.mrb[0].mxu0
      %v1055 = vadd.f32 %v878, %v1054
      %v1056 = vpop.f32.mrb[0].mxu0
      %1057 = vmatprep.mubr.bf16.mxu0 0
      %1058 = vmatmul.mubr.bf16.gmra.mrb[0].mxu0 %v947
      %v1059 = vpop.f32.mrb[0].mxu0
      %v1060 = vadd.f32 %v883, %v1059
      %v1061 = vpop.f32.mrb[0].mxu0
      %v1062 = vpop.f32.mrb[0].mxu0
      %v1063 = vadd.f32 %v886, %v1062
      %v1064 = vpop.f32.mrb[0].mxu0
      %1065 = vmatprep.mubr.bf16.mxu0 0
      %1066 = vmatmul.mubr.bf16.gmra.mrb[0].mxu0 %v948
      %v1067 = vpop.f32.mrb[0].mxu0
      %v1068 = vadd.f32 %v891, %v1067
      %v1069 = vpop.f32.mrb[0].mxu0
      %v1070 = vpop.f32.mrb[0].mxu0
      %v1071 = vadd.f32 %v894, %v1070
      %v1072 = vpop.f32.mrb[0].mxu0
      %1073 = vmatprep.mubr.bf16.mxu0 0
      %1074 = vmatmul.mubr.bf16.gmra.mrb[0].mxu0 %v949
      %v1075 = vpop.f32.mrb[0].mxu0
      %v1076 = vadd.f32 %v899, %v1075
      %v1077 = vpop.f32.mrb[0].mxu0
      %v1078 = vpop.f32.mrb[0].mxu0
      %v1079 = vadd.f32 %v902, %v1078
      %v1080 = vpop.f32.mrb[0].mxu0
      %1081 = vmatprep.mubr.bf16.mxu0 0
      %1082 = vmatmul.mubr.bf16.gmra.mrb[0].mxu0 %v950
      %v1083 = vpop.f32.mrb[0].mxu0
      %v1084 = vadd.f32 %v907, %v1083
      %v1085 = vpop.f32.mrb[0].mxu0
      %v1086 = vpop.f32.mrb[0].mxu0
      %v1087 = vadd.f32 %v910, %v1086
      %v1088 = vpop.f32.mrb[0].mxu0
      %1089 = vmatprep.mubr.bf16.mxu0 0
      %1090 = vmatmul.mubr.bf16.gmra.mrb[0].mxu0 %v951
      %v1091 = vpop.f32.mrb[0].mxu0
      %v1092 = vadd.f32 %v915, %v1091
      %v1093 = vpop.f32.mrb[0].mxu0
      %v1094 = vpop.f32.mrb[0].mxu0
      %v1095 = vadd.f32 %v918, %v1094
      %v1096 = vpop.f32.mrb[0].mxu0
      %1097 = vmatprep.mubr.bf16.mxu0 0
      %1098 = vmatmul.mubr.bf16.gmra.mrb[0].mxu0 %v952
      %v1099 = vpop.f32.mrb[0].mxu0
      %v1100 = vadd.f32 %v923, %v1099
      %v1101 = vpop.f32.mrb[0].mxu0
      %v1102 = vpop.f32.mrb[0].mxu0
      %v1103 = vadd.f32 %v926, %v1102
      %v1104 = vpop.f32.mrb[0].mxu0
      %1105 = vdwg.mxu0
      %s1106 = scalar_lea.vmem %s304, 128
      %v1107 = vld [vmem:[%s1106] sm:$0xf]
      %v1108 = vld [vmem:[%s1106 + $0x4] sm:$0xf]
      %v1109 = vld [vmem:[%s1106 + $0x8] sm:$0xf]
      %v1110 = vld [vmem:[%s1106 + $0xc] sm:$0xf]
      %v1111 = vld [vmem:[%s1106 + $0x10] sm:$0xf]
      %v1112 = vld [vmem:[%s1106 + $0x14] sm:$0xf]
      %v1113 = vld [vmem:[%s1106 + $0x18] sm:$0xf]
      %v1114 = vld [vmem:[%s1106 + $0x1c] sm:$0xf]
      %v1115 = vld [vmem:[%s1106 + $0x20] sm:$0xf]
      %v1116 = vld [vmem:[%s1106 + $0x24] sm:$0xf]
      %v1117 = vld [vmem:[%s1106 + $0x28] sm:$0xf]
      %v1118 = vld [vmem:[%s1106 + $0x2c] sm:$0xf]
      %v1119 = vld [vmem:[%s1106 + $0x30] sm:$0xf]
      %v1120 = vld [vmem:[%s1106 + $0x34] sm:$0xf]
      %v1121 = vld [vmem:[%s1106 + $0x38] sm:$0xf]
      %v1122 = vld [vmem:[%s1106 + $0x3c] sm:$0xf]
      %v1123 = vunpack.c.l.b16 %v652
      %v1124 = vunpack.c.l.b16 %v655
      %v1125 = vunpack.c.l.b16 %v659
      %v1126 = vunpack.c.l.b16 %v662
      %v1127 = vunpack.c.l.b16 %v666
      %v1128 = vunpack.c.l.b16 %v669
      %v1129 = vunpack.c.l.b16 %v673
      %v1130 = vunpack.c.l.b16 %v676
      %v1131 = vunpack.c.l.b16 %v680
      %v1132 = vunpack.c.l.b16 %v683
      %v1133 = vunpack.c.l.b16 %v687
      %v1134 = vunpack.c.l.b16 %v690
      %v1135 = vunpack.c.l.b16 %v694
      %v1136 = vunpack.c.l.b16 %v697
      %v1137 = vunpack.c.l.b16 %v701
      %v1138 = vunpack.c.l.b16 %v704
      %v1139 = vpack.c.b16 %v1124, %v1123
      %v1140 = vpack.c.b16 %v1126, %v1125
      %v1141 = vpack.c.b16 %v1128, %v1127
      %v1142 = vpack.c.b16 %v1130, %v1129
      %v1143 = vpack.c.b16 %v1132, %v1131
      %v1144 = vpack.c.b16 %v1134, %v1133
      %v1145 = vpack.c.b16 %v1136, %v1135
      %v1146 = vpack.c.b16 %v1138, %v1137
      %v1171 = vunpack.c.l.b16 %v1107
      %v1172 = vunpack.c.l.b16 %v1108
      %v1173 = vunpack.c.l.b16 %v1109
      %v1174 = vunpack.c.l.b16 %v1110
      %v1175 = vunpack.c.l.b16 %v1111
      %v1176 = vunpack.c.l.b16 %v1112
      %v1177 = vunpack.c.l.b16 %v1113
      %v1178 = vunpack.c.l.b16 %v1114
      %v1179 = vunpack.c.l.b16 %v1115
      %v1180 = vunpack.c.l.b16 %v1116
      %v1181 = vunpack.c.l.b16 %v1117
      %v1182 = vunpack.c.l.b16 %v1118
      %v1183 = vunpack.c.l.b16 %v1119
      %v1184 = vunpack.c.l.b16 %v1120
      %v1185 = vunpack.c.l.b16 %v1121
      %v1186 = vunpack.c.l.b16 %v1122
      %v1187 = vpack.c.b16 %v1172, %v1171
      %v1188 = vpack.c.b16 %v1174, %v1173
      %v1189 = vpack.c.b16 %v1176, %v1175
      %v1190 = vpack.c.b16 %v1178, %v1177
      %v1191 = vpack.c.b16 %v1180, %v1179
      %v1192 = vpack.c.b16 %v1182, %v1181
      %v1193 = vpack.c.b16 %v1184, %v1183
      %v1194 = vpack.c.b16 %v1186, %v1185
      %1203 = vmatprep.subr.bf16.mxu0 0
      %1204 = vmatpush1.bf16.msra.mxu0 %v1187
      %1205 = vmatprep.subr.bf16.mxu0 0
      %1206 = vmatpush1.bf16.msra.mxu0 %v1188
      %1207 = vmatprep.subr.bf16.mxu0 0
      %1208 = vmatpush1.bf16.msra.mxu0 %v1189
      %1209 = vmatprep.subr.bf16.mxu0 0
      %1210 = vmatpush1.bf16.msra.mxu0 %v1190
      %1211 = vmatprep.subr.bf16.mxu0 0
      %1212 = vmatpush1.bf16.msra.mxu0 %v1191
      %1213 = vmatprep.subr.bf16.mxu0 0
      %1214 = vmatpush1.bf16.msra.mxu0 %v1192
      %1215 = vmatprep.subr.bf16.mxu0 0
      %1216 = vmatpush1.bf16.msra.mxu0 %v1193
      %1217 = vmatprep.subr.bf16.mxu0 0
      %1218 = vmatpush1.bf16.msra.mxu0 %v1194
      %1219 = vmatprep.subr.bf16.mxu0 0
      %1220 = vmatpush1.bf16.msra.mxu0 0
      %1221 = vmatprep.subr.bf16.mxu0 0
      %1222 = vmatpush1.bf16.msra.mxu0 0
      %1223 = vmatprep.subr.bf16.mxu0 0
      %1224 = vmatpush1.bf16.msra.mxu0 0
      %1225 = vmatprep.subr.bf16.mxu0 0
      %1226 = vmatpush1.bf16.msra.mxu0 0
      %1227 = vmatprep.subr.bf16.mxu0 0
      %1228 = vmatpush1.bf16.msra.mxu0 0
      %1229 = vmatprep.subr.bf16.mxu0 0
      %1230 = vmatpush1.bf16.msra.mxu0 0
      %1231 = vmatprep.subr.bf16.mxu0 0
      %1232 = vmatpush1.bf16.msra.mxu0 0
      %1233 = vmatprep.subr.bf16.mxu0 0
      %1234 = vmatpush1.bf16.msra.mxu0 0
      %1235 = vmatprep.mubr.bf16.mxu0 0
      %1236 = vmatmul.mubr.bf16.gmra.mrb[0].mxu0 %v1139
      %v1237 = vpop.f32.mrb[0].mxu0
      %v1238 = vadd.f32 0.0, %v1237
      %v1239 = vpop.f32.mrb[0].mxu0
      %v1240 = vpop.f32.mrb[0].mxu0
      %v1241 = vadd.f32 0.0, %v1240
      %v1242 = vpop.f32.mrb[0].mxu0
      %1243 = vmatprep.mubr.bf16.mxu0 0
      %1244 = vmatmul.mubr.bf16.gmra.mrb[0].mxu0 %v1140
      %v1245 = vpop.f32.mrb[0].mxu0
      %v1246 = vadd.f32 0.0, %v1245
      %v1247 = vpop.f32.mrb[0].mxu0
      %v1248 = vpop.f32.mrb[0].mxu0
      %v1249 = vadd.f32 0.0, %v1248
      %v1250 = vpop.f32.mrb[0].mxu0
      %1251 = vmatprep.mubr.bf16.mxu0 0
      %1252 = vmatmul.mubr.bf16.gmra.mrb[0].mxu0 %v1141
      %v1253 = vpop.f32.mrb[0].mxu0
      %v1254 = vadd.f32 0.0, %v1253
      %v1255 = vpop.f32.mrb[0].mxu0
      %v1256 = vpop.f32.mrb[0].mxu0
      %v1257 = vadd.f32 0.0, %v1256
      %v1258 = vpop.f32.mrb[0].mxu0
      %1259 = vmatprep.mubr.bf16.mxu0 0
      %1260 = vmatmul.mubr.bf16.gmra.mrb[0].mxu0 %v1142
      %v1261 = vpop.f32.mrb[0].mxu0
      %v1262 = vadd.f32 0.0, %v1261
      %v1263 = vpop.f32.mrb[0].mxu0
      %v1264 = vpop.f32.mrb[0].mxu0
      %v1265 = vadd.f32 0.0, %v1264
      %v1266 = vpop.f32.mrb[0].mxu0
      %1267 = vmatprep.mubr.bf16.mxu0 0
      %1268 = vmatmul.mubr.bf16.gmra.mrb[0].mxu0 %v1143
      %v1269 = vpop.f32.mrb[0].mxu0
      %v1270 = vadd.f32 0.0, %v1269
      %v1271 = vpop.f32.mrb[0].mxu0
      %v1272 = vpop.f32.mrb[0].mxu0
      %v1273 = vadd.f32 0.0, %v1272
      %v1274 = vpop.f32.mrb[0].mxu0
      %1275 = vmatprep.mubr.bf16.mxu0 0
      %1276 = vmatmul.mubr.bf16.gmra.mrb[0].mxu0 %v1144
      %v1277 = vpop.f32.mrb[0].mxu0
      %v1278 = vadd.f32 0.0, %v1277
      %v1279 = vpop.f32.mrb[0].mxu0
      %v1280 = vpop.f32.mrb[0].mxu0
      %v1281 = vadd.f32 0.0, %v1280
      %v1282 = vpop.f32.mrb[0].mxu0
      %1283 = vmatprep.mubr.bf16.mxu0 0
      %1284 = vmatmul.mubr.bf16.gmra.mrb[0].mxu0 %v1145
      %v1285 = vpop.f32.mrb[0].mxu0
      %v1286 = vadd.f32 0.0, %v1285
      %v1287 = vpop.f32.mrb[0].mxu0
      %v1288 = vpop.f32.mrb[0].mxu0
      %v1289 = vadd.f32 0.0, %v1288
      %v1290 = vpop.f32.mrb[0].mxu0
      %1291 = vmatprep.mubr.bf16.mxu0 0
      %1292 = vmatmul.mubr.bf16.gmra.mrb[0].mxu0 %v1146
      %v1293 = vpop.f32.mrb[0].mxu0
      %v1294 = vadd.f32 0.0, %v1293
      %v1295 = vpop.f32.mrb[0].mxu0
      %v1296 = vpop.f32.mrb[0].mxu0
      %v1297 = vadd.f32 0.0, %v1296
      %v1298 = vpop.f32.mrb[0].mxu0
      %1299 = vdwg.mxu0
      %v1300 = vadd.f32 %v1044, %v1238
      %v1301 = vadd.f32 %v1047, %v1241
      %v1302 = vadd.f32 %v1052, %v1246
      %v1303 = vadd.f32 %v1055, %v1249
      %v1304 = vadd.f32 %v1060, %v1254
      %v1305 = vadd.f32 %v1063, %v1257
      %v1306 = vadd.f32 %v1068, %v1262
      %v1307 = vadd.f32 %v1071, %v1265
      %v1308 = vadd.f32 %v1076, %v1270
      %v1309 = vadd.f32 %v1079, %v1273
      %v1310 = vadd.f32 %v1084, %v1278
      %v1311 = vadd.f32 %v1087, %v1281
      %v1312 = vadd.f32 %v1092, %v1286
      %v1313 = vadd.f32 %v1095, %v1289
      %v1314 = vadd.f32 %v1100, %v1294
      %v1315 = vadd.f32 %v1103, %v1297
      %s1316 = scalar_lea.vmem %s304, 192
      %v1317 = vld [vmem:[%s1316] sm:$0xf]
      %v1318 = vld [vmem:[%s1316 + $0x4] sm:$0xf]
      %v1319 = vld [vmem:[%s1316 + $0x8] sm:$0xf]
      %v1320 = vld [vmem:[%s1316 + $0xc] sm:$0xf]
      %v1321 = vld [vmem:[%s1316 + $0x10] sm:$0xf]
      %v1322 = vld [vmem:[%s1316 + $0x14] sm:$0xf]
      %v1323 = vld [vmem:[%s1316 + $0x18] sm:$0xf]
      %v1324 = vld [vmem:[%s1316 + $0x1c] sm:$0xf]
      %v1325 = vld [vmem:[%s1316 + $0x20] sm:$0xf]
      %v1326 = vld [vmem:[%s1316 + $0x24] sm:$0xf]
      %v1327 = vld [vmem:[%s1316 + $0x28] sm:$0xf]
      %v1328 = vld [vmem:[%s1316 + $0x2c] sm:$0xf]
      %v1329 = vld [vmem:[%s1316 + $0x30] sm:$0xf]
      %v1330 = vld [vmem:[%s1316 + $0x34] sm:$0xf]
      %v1331 = vld [vmem:[%s1316 + $0x38] sm:$0xf]
      %v1332 = vld [vmem:[%s1316 + $0x3c] sm:$0xf]
      %v1333 = vunpack.c.l.b16 %v367
      %v1334 = vunpack.c.l.b16 %v368
      %v1335 = vpack.c.b16 %v1334, %v1333
      %v1353 = vunpack.c.l.b16 %v1317
      %v1354 = vunpack.c.l.b16 %v1318
      %v1355 = vunpack.c.l.b16 %v1319
      %v1356 = vunpack.c.l.b16 %v1320
      %v1357 = vunpack.c.l.b16 %v1321
      %v1358 = vunpack.c.l.b16 %v1322
      %v1359 = vunpack.c.l.b16 %v1323
      %v1360 = vunpack.c.l.b16 %v1324
      %v1361 = vunpack.c.l.b16 %v1325
      %v1362 = vunpack.c.l.b16 %v1326
      %v1363 = vunpack.c.l.b16 %v1327
      %v1364 = vunpack.c.l.b16 %v1328
      %v1365 = vunpack.c.l.b16 %v1329
      %v1366 = vunpack.c.l.b16 %v1330
      %v1367 = vunpack.c.l.b16 %v1331
      %v1368 = vunpack.c.l.b16 %v1332
      %v1369 = vpack.c.b16 %v1354, %v1353
      %v1370 = vpack.c.b16 %v1356, %v1355
      %v1371 = vpack.c.b16 %v1358, %v1357
      %v1372 = vpack.c.b16 %v1360, %v1359
      %v1373 = vpack.c.b16 %v1362, %v1361
      %v1374 = vpack.c.b16 %v1364, %v1363
      %v1375 = vpack.c.b16 %v1366, %v1365
      %v1376 = vpack.c.b16 %v1368, %v1367
      %1385 = vmatprep.subr.bf16.mxu0 0
      %1386 = vmatpush1.bf16.msra.mxu0 %v1369
      %1387 = vmatprep.subr.bf16.mxu0 0
      %1388 = vmatpush1.bf16.msra.mxu0 %v1370
      %1389 = vmatprep.subr.bf16.mxu0 0
      %1390 = vmatpush1.bf16.msra.mxu0 %v1371
      %1391 = vmatprep.subr.bf16.mxu0 0
      %1392 = vmatpush1.bf16.msra.mxu0 %v1372
      %1393 = vmatprep.subr.bf16.mxu0 0
      %1394 = vmatpush1.bf16.msra.mxu0 %v1373
      %1395 = vmatprep.subr.bf16.mxu0 0
      %1396 = vmatpush1.bf16.msra.mxu0 %v1374
      %1397 = vmatprep.subr.bf16.mxu0 0
      %1398 = vmatpush1.bf16.msra.mxu0 %v1375
      %1399 = vmatprep.subr.bf16.mxu0 0
      %1400 = vmatpush1.bf16.msra.mxu0 %v1376
      %1401 = vmatprep.subr.bf16.mxu0 0
      %1402 = vmatpush1.bf16.msra.mxu0 0
      %1403 = vmatprep.subr.bf16.mxu0 0
      %1404 = vmatpush1.bf16.msra.mxu0 0
      %1405 = vmatprep.subr.bf16.mxu0 0
      %1406 = vmatpush1.bf16.msra.mxu0 0
      %1407 = vmatprep.subr.bf16.mxu0 0
      %1408 = vmatpush1.bf16.msra.mxu0 0
      %1409 = vmatprep.subr.bf16.mxu0 0
      %1410 = vmatpush1.bf16.msra.mxu0 0
      %1411 = vmatprep.subr.bf16.mxu0 0
      %1412 = vmatpush1.bf16.msra.mxu0 0
      %1413 = vmatprep.subr.bf16.mxu0 0
      %1414 = vmatpush1.bf16.msra.mxu0 0
      %1415 = vmatprep.subr.bf16.mxu0 0
      %1416 = vmatpush1.bf16.msra.mxu0 0
      %1417 = vmatprep.mubr.bf16.mxu0 0
      %1418 = vmatmul.mubr.bf16.gmra.mrb[0].mxu0 %v946
      %v1419 = vpop.f32.mrb[0].mxu0
      %v1420 = vadd.f32 0.0, %v1419
      %v1421 = vpop.f32.mrb[0].mxu0
      %v1422 = vpop.f32.mrb[0].mxu0
      %v1423 = vadd.f32 0.0, %v1422
      %v1424 = vpop.f32.mrb[0].mxu0
      %1425 = vmatprep.mubr.bf16.mxu0 0
      %1426 = vmatmul.mubr.bf16.gmra.mrb[0].mxu0 %v947
      %v1427 = vpop.f32.mrb[0].mxu0
      %v1428 = vadd.f32 0.0, %v1427
      %v1429 = vpop.f32.mrb[0].mxu0
      %v1430 = vpop.f32.mrb[0].mxu0
      %v1431 = vadd.f32 0.0, %v1430
      %v1432 = vpop.f32.mrb[0].mxu0
      %1433 = vmatprep.mubr.bf16.mxu0 0
      %1434 = vmatmul.mubr.bf16.gmra.mrb[0].mxu0 %v948
      %v1435 = vpop.f32.mrb[0].mxu0
      %v1436 = vadd.f32 0.0, %v1435
      %v1437 = vpop.f32.mrb[0].mxu0
      %v1438 = vpop.f32.mrb[0].mxu0
      %v1439 = vadd.f32 0.0, %v1438
      %v1440 = vpop.f32.mrb[0].mxu0
      %1441 = vmatprep.mubr.bf16.mxu0 0
      %1442 = vmatmul.mubr.bf16.gmra.mrb[0].mxu0 %v949
      %v1443 = vpop.f32.mrb[0].mxu0
      %v1444 = vadd.f32 0.0, %v1443
      %v1445 = vpop.f32.mrb[0].mxu0
      %v1446 = vpop.f32.mrb[0].mxu0
      %v1447 = vadd.f32 0.0, %v1446
      %v1448 = vpop.f32.mrb[0].mxu0
      %1449 = vmatprep.mubr.bf16.mxu0 0
      %1450 = vmatmul.mubr.bf16.gmra.mrb[0].mxu0 %v950
      %v1451 = vpop.f32.mrb[0].mxu0
      %v1452 = vadd.f32 0.0, %v1451
      %v1453 = vpop.f32.mrb[0].mxu0
      %v1454 = vpop.f32.mrb[0].mxu0
      %v1455 = vadd.f32 0.0, %v1454
      %v1456 = vpop.f32.mrb[0].mxu0
      %1457 = vmatprep.mubr.bf16.mxu0 0
      %1458 = vmatmul.mubr.bf16.gmra.mrb[0].mxu0 %v951
      %v1459 = vpop.f32.mrb[0].mxu0
      %v1460 = vadd.f32 0.0, %v1459
      %v1461 = vpop.f32.mrb[0].mxu0
      %v1462 = vpop.f32.mrb[0].mxu0
      %v1463 = vadd.f32 0.0, %v1462
      %v1464 = vpop.f32.mrb[0].mxu0
      %1465 = vmatprep.mubr.bf16.mxu0 0
      %1466 = vmatmul.mubr.bf16.gmra.mrb[0].mxu0 %v952
      %v1467 = vpop.f32.mrb[0].mxu0
      %v1468 = vadd.f32 0.0, %v1467
      %v1469 = vpop.f32.mrb[0].mxu0
      %v1470 = vpop.f32.mrb[0].mxu0
      %v1471 = vadd.f32 0.0, %v1470
      %v1472 = vpop.f32.mrb[0].mxu0
      %1473 = vmatprep.mubr.bf16.mxu0 0
      %1474 = vmatmul.mubr.bf16.gmra.mrb[0].mxu0 %v1335
      %v1475 = vpop.f32.mrb[0].mxu0
      %v1476 = vadd.f32 0.0, %v1475
      %v1477 = vpop.f32.mrb[0].mxu0
      %v1478 = vpop.f32.mrb[0].mxu0
      %v1479 = vadd.f32 0.0, %v1478
      %v1480 = vpop.f32.mrb[0].mxu0
      %1481 = vdwg.mxu0
      %v1482 = vadd.f32 %v1300, %v1420
      %v1483 = vadd.f32 %v1301, %v1423
      %v1484 = vadd.f32 %v1302, %v1428
      %v1485 = vadd.f32 %v1303, %v1431
      %v1486 = vadd.f32 %v1304, %v1436
      %v1487 = vadd.f32 %v1305, %v1439
      %v1488 = vadd.f32 %v1306, %v1444
      %v1489 = vadd.f32 %v1307, %v1447
      %v1490 = vadd.f32 %v1308, %v1452
      %v1491 = vadd.f32 %v1309, %v1455
      %v1492 = vadd.f32 %v1310, %v1460
      %v1493 = vadd.f32 %v1311, %v1463
      %v1494 = vadd.f32 %v1312, %v1468
      %v1495 = vadd.f32 %v1313, %v1471
      %v1496 = vadd.f32 %v1314, %v1476
      %v1497 = vadd.f32 %v1315, %v1479
      %s1498 = scalar_lea.vmem %s304, 256
      %v1499 = vld [vmem:[%s1498] sm:$0xf]
      %v1500 = vld [vmem:[%s1498 + $0x4] sm:$0xf]
      %v1501 = vld [vmem:[%s1498 + $0x8] sm:$0xf]
      %v1502 = vld [vmem:[%s1498 + $0xc] sm:$0xf]
      %v1503 = vld [vmem:[%s1498 + $0x10] sm:$0xf]
      %v1504 = vld [vmem:[%s1498 + $0x14] sm:$0xf]
      %v1505 = vld [vmem:[%s1498 + $0x18] sm:$0xf]
      %v1506 = vld [vmem:[%s1498 + $0x1c] sm:$0xf]
      %v1507 = vld [vmem:[%s1498 + $0x20] sm:$0xf]
      %v1508 = vld [vmem:[%s1498 + $0x24] sm:$0xf]
      %v1509 = vld [vmem:[%s1498 + $0x28] sm:$0xf]
      %v1510 = vld [vmem:[%s1498 + $0x2c] sm:$0xf]
      %v1511 = vld [vmem:[%s1498 + $0x30] sm:$0xf]
      %v1512 = vld [vmem:[%s1498 + $0x34] sm:$0xf]
      %v1513 = vld [vmem:[%s1498 + $0x38] sm:$0xf]
      %v1514 = vld [vmem:[%s1498 + $0x3c] sm:$0xf]
      %v1515 = vunpack.c.l.b16 %v581
      %v1516 = vunpack.c.l.b16 %v591
      %v1517 = vpack.c.b16 %v1516, %v1515
      %v1535 = vunpack.c.l.b16 %v1499
      %v1536 = vunpack.c.l.b16 %v1500
      %v1537 = vunpack.c.l.b16 %v1501
      %v1538 = vunpack.c.l.b16 %v1502
      %v1539 = vunpack.c.l.b16 %v1503
      %v1540 = vunpack.c.l.b16 %v1504
      %v1541 = vunpack.c.l.b16 %v1505
      %v1542 = vunpack.c.l.b16 %v1506
      %v1543 = vunpack.c.l.b16 %v1507
      %v1544 = vunpack.c.l.b16 %v1508
      %v1545 = vunpack.c.l.b16 %v1509
      %v1546 = vunpack.c.l.b16 %v1510
      %v1547 = vunpack.c.l.b16 %v1511
      %v1548 = vunpack.c.l.b16 %v1512
      %v1549 = vunpack.c.l.b16 %v1513
      %v1550 = vunpack.c.l.b16 %v1514
      %v1551 = vpack.c.b16 %v1536, %v1535
      %v1552 = vpack.c.b16 %v1538, %v1537
      %v1553 = vpack.c.b16 %v1540, %v1539
      %v1554 = vpack.c.b16 %v1542, %v1541
      %v1555 = vpack.c.b16 %v1544, %v1543
      %v1556 = vpack.c.b16 %v1546, %v1545
      %v1557 = vpack.c.b16 %v1548, %v1547
      %v1558 = vpack.c.b16 %v1550, %v1549
      %1567 = vmatprep.subr.bf16.mxu0 0
      %1568 = vmatpush1.bf16.msra.mxu0 %v1551
      %1569 = vmatprep.subr.bf16.mxu0 0
      %1570 = vmatpush1.bf16.msra.mxu0 %v1552
      %1571 = vmatprep.subr.bf16.mxu0 0
      %1572 = vmatpush1.bf16.msra.mxu0 %v1553
      %1573 = vmatprep.subr.bf16.mxu0 0
      %1574 = vmatpush1.bf16.msra.mxu0 %v1554
      %1575 = vmatprep.subr.bf16.mxu0 0
      %1576 = vmatpush1.bf16.msra.mxu0 %v1555
      %1577 = vmatprep.subr.bf16.mxu0 0
      %1578 = vmatpush1.bf16.msra.mxu0 %v1556
      %1579 = vmatprep.subr.bf16.mxu0 0
      %1580 = vmatpush1.bf16.msra.mxu0 %v1557
      %1581 = vmatprep.subr.bf16.mxu0 0
      %1582 = vmatpush1.bf16.msra.mxu0 %v1558
      %1583 = vmatprep.subr.bf16.mxu0 0
      %1584 = vmatpush1.bf16.msra.mxu0 0
      %1585 = vmatprep.subr.bf16.mxu0 0
      %1586 = vmatpush1.bf16.msra.mxu0 0
      %1587 = vmatprep.subr.bf16.mxu0 0
      %1588 = vmatpush1.bf16.msra.mxu0 0
      %1589 = vmatprep.subr.bf16.mxu0 0
      %1590 = vmatpush1.bf16.msra.mxu0 0
      %1591 = vmatprep.subr.bf16.mxu0 0
      %1592 = vmatpush1.bf16.msra.mxu0 0
      %1593 = vmatprep.subr.bf16.mxu0 0
      %1594 = vmatpush1.bf16.msra.mxu0 0
      %1595 = vmatprep.subr.bf16.mxu0 0
      %1596 = vmatpush1.bf16.msra.mxu0 0
      %1597 = vmatprep.subr.bf16.mxu0 0
      %1598 = vmatpush1.bf16.msra.mxu0 0
      %1599 = vmatprep.mubr.bf16.mxu0 0
      %1600 = vmatmul.mubr.bf16.gmra.mrb[0].mxu0 %v769
      %v1601 = vpop.f32.mrb[0].mxu0
      %v1602 = vadd.f32 0.0, %v1601
      %v1603 = vpop.f32.mrb[0].mxu0
      %v1604 = vpop.f32.mrb[0].mxu0
      %v1605 = vadd.f32 0.0, %v1604
      %v1606 = vpop.f32.mrb[0].mxu0
      %1607 = vmatprep.mubr.bf16.mxu0 0
      %1608 = vmatmul.mubr.bf16.gmra.mrb[0].mxu0 %v770
      %v1609 = vpop.f32.mrb[0].mxu0
      %v1610 = vadd.f32 0.0, %v1609
      %v1611 = vpop.f32.mrb[0].mxu0
      %v1612 = vpop.f32.mrb[0].mxu0
      %v1613 = vadd.f32 0.0, %v1612
      %v1614 = vpop.f32.mrb[0].mxu0
      %1615 = vmatprep.mubr.bf16.mxu0 0
      %1616 = vmatmul.mubr.bf16.gmra.mrb[0].mxu0 %v771
      %v1617 = vpop.f32.mrb[0].mxu0
      %v1618 = vadd.f32 0.0, %v1617
      %v1619 = vpop.f32.mrb[0].mxu0
      %v1620 = vpop.f32.mrb[0].mxu0
      %v1621 = vadd.f32 0.0, %v1620
      %v1622 = vpop.f32.mrb[0].mxu0
      %1623 = vmatprep.mubr.bf16.mxu0 0
      %1624 = vmatmul.mubr.bf16.gmra.mrb[0].mxu0 %v772
      %v1625 = vpop.f32.mrb[0].mxu0
      %v1626 = vadd.f32 0.0, %v1625
      %v1627 = vpop.f32.mrb[0].mxu0
      %v1628 = vpop.f32.mrb[0].mxu0
      %v1629 = vadd.f32 0.0, %v1628
      %v1630 = vpop.f32.mrb[0].mxu0
      %1631 = vmatprep.mubr.bf16.mxu0 0
      %1632 = vmatmul.mubr.bf16.gmra.mrb[0].mxu0 %v773
      %v1633 = vpop.f32.mrb[0].mxu0
      %v1634 = vadd.f32 0.0, %v1633
      %v1635 = vpop.f32.mrb[0].mxu0
      %v1636 = vpop.f32.mrb[0].mxu0
      %v1637 = vadd.f32 0.0, %v1636
      %v1638 = vpop.f32.mrb[0].mxu0
      %1639 = vmatprep.mubr.bf16.mxu0 0
      %1640 = vmatmul.mubr.bf16.gmra.mrb[0].mxu0 %v774
      %v1641 = vpop.f32.mrb[0].mxu0
      %v1642 = vadd.f32 0.0, %v1641
      %v1643 = vpop.f32.mrb[0].mxu0
      %v1644 = vpop.f32.mrb[0].mxu0
      %v1645 = vadd.f32 0.0, %v1644
      %v1646 = vpop.f32.mrb[0].mxu0
      %1647 = vmatprep.mubr.bf16.mxu0 0
      %1648 = vmatmul.mubr.bf16.gmra.mrb[0].mxu0 %v775
      %v1649 = vpop.f32.mrb[0].mxu0
      %v1650 = vadd.f32 0.0, %v1649
      %v1651 = vpop.f32.mrb[0].mxu0
      %v1652 = vpop.f32.mrb[0].mxu0
      %v1653 = vadd.f32 0.0, %v1652
      %v1654 = vpop.f32.mrb[0].mxu0
      %1655 = vmatprep.mubr.bf16.mxu0 0
      %1656 = vmatmul.mubr.bf16.gmra.mrb[0].mxu0 %v1517
      %v1657 = vpop.f32.mrb[0].mxu0
      %v1658 = vadd.f32 0.0, %v1657
      %v1659 = vpop.f32.mrb[0].mxu0
      %v1660 = vpop.f32.mrb[0].mxu0
      %v1661 = vadd.f32 0.0, %v1660
      %v1662 = vpop.f32.mrb[0].mxu0
      %1663 = vdwg.mxu0
      %v1664 = vadd.f32 %v1482, %v1602
      %v1665 = vadd.f32 %v1483, %v1605
      %v1666 = vadd.f32 %v1484, %v1610
      %v1667 = vadd.f32 %v1485, %v1613
      %v1668 = vadd.f32 %v1486, %v1618
      %v1669 = vadd.f32 %v1487, %v1621
      %v1670 = vadd.f32 %v1488, %v1626
      %v1671 = vadd.f32 %v1489, %v1629
      %v1672 = vadd.f32 %v1490, %v1634
      %v1673 = vadd.f32 %v1491, %v1637
      %v1674 = vadd.f32 %v1492, %v1642
      %v1675 = vadd.f32 %v1493, %v1645
      %v1676 = vadd.f32 %v1494, %v1650
      %v1677 = vadd.f32 %v1495, %v1653
      %v1678 = vadd.f32 %v1496, %v1658
      %v1679 = vadd.f32 %v1497, %v1661
      %s1680 = scalar_lea.vmem %s304, 320
      %v1681 = vld [vmem:[%s1680] sm:$0xf]
      %v1682 = vld [vmem:[%s1680 + $0x4] sm:$0xf]
      %v1683 = vld [vmem:[%s1680 + $0x8] sm:$0xf]
      %v1684 = vld [vmem:[%s1680 + $0xc] sm:$0xf]
      %v1685 = vld [vmem:[%s1680 + $0x10] sm:$0xf]
      %v1686 = vld [vmem:[%s1680 + $0x14] sm:$0xf]
      %v1687 = vld [vmem:[%s1680 + $0x18] sm:$0xf]
      %v1688 = vld [vmem:[%s1680 + $0x1c] sm:$0xf]
      %v1689 = vld [vmem:[%s1680 + $0x20] sm:$0xf]
      %v1690 = vld [vmem:[%s1680 + $0x24] sm:$0xf]
      %v1691 = vld [vmem:[%s1680 + $0x28] sm:$0xf]
      %v1692 = vld [vmem:[%s1680 + $0x2c] sm:$0xf]
      %v1693 = vld [vmem:[%s1680 + $0x30] sm:$0xf]
      %v1694 = vld [vmem:[%s1680 + $0x34] sm:$0xf]
      %v1695 = vld [vmem:[%s1680 + $0x38] sm:$0xf]
      %v1696 = vld [vmem:[%s1680 + $0x3c] sm:$0xf]
      %v1697 = vunpack.c.l.b16 %v708
      %v1698 = vunpack.c.l.b16 %v711
      %v1699 = vpack.c.b16 %v1698, %v1697
      %v1717 = vunpack.c.l.b16 %v1681
      %v1718 = vunpack.c.l.b16 %v1682
      %v1719 = vunpack.c.l.b16 %v1683
      %v1720 = vunpack.c.l.b16 %v1684
      %v1721 = vunpack.c.l.b16 %v1685
      %v1722 = vunpack.c.l.b16 %v1686
      %v1723 = vunpack.c.l.b16 %v1687
      %v1724 = vunpack.c.l.b16 %v1688
      %v1725 = vunpack.c.l.b16 %v1689
      %v1726 = vunpack.c.l.b16 %v1690
      %v1727 = vunpack.c.l.b16 %v1691
      %v1728 = vunpack.c.l.b16 %v1692
      %v1729 = vunpack.c.l.b16 %v1693
      %v1730 = vunpack.c.l.b16 %v1694
      %v1731 = vunpack.c.l.b16 %v1695
      %v1732 = vunpack.c.l.b16 %v1696
      %v1733 = vpack.c.b16 %v1718, %v1717
      %v1734 = vpack.c.b16 %v1720, %v1719
      %v1735 = vpack.c.b16 %v1722, %v1721
      %v1736 = vpack.c.b16 %v1724, %v1723
      %v1737 = vpack.c.b16 %v1726, %v1725
      %v1738 = vpack.c.b16 %v1728, %v1727
      %v1739 = vpack.c.b16 %v1730, %v1729
      %v1740 = vpack.c.b16 %v1732, %v1731
      %1749 = vmatprep.subr.bf16.mxu0 0
      %1750 = vmatpush1.bf16.msra.mxu0 %v1733
      %1751 = vmatprep.subr.bf16.mxu0 0
      %1752 = vmatpush1.bf16.msra.mxu0 %v1734
      %1753 = vmatprep.subr.bf16.mxu0 0
      %1754 = vmatpush1.bf16.msra.mxu0 %v1735
      %1755 = vmatprep.subr.bf16.mxu0 0
      %1756 = vmatpush1.bf16.msra.mxu0 %v1736
      %1757 = vmatprep.subr.bf16.mxu0 0
      %1758 = vmatpush1.bf16.msra.mxu0 %v1737
      %1759 = vmatprep.subr.bf16.mxu0 0
      %1760 = vmatpush1.bf16.msra.mxu0 %v1738
      %1761 = vmatprep.subr.bf16.mxu0 0
      %1762 = vmatpush1.bf16.msra.mxu0 %v1739
      %1763 = vmatprep.subr.bf16.mxu0 0
      %1764 = vmatpush1.bf16.msra.mxu0 %v1740
      %1765 = vmatprep.subr.bf16.mxu0 0
      %1766 = vmatpush1.bf16.msra.mxu0 0
      %1767 = vmatprep.subr.bf16.mxu0 0
      %1768 = vmatpush1.bf16.msra.mxu0 0
      %1769 = vmatprep.subr.bf16.mxu0 0
      %1770 = vmatpush1.bf16.msra.mxu0 0
      %1771 = vmatprep.subr.bf16.mxu0 0
      %1772 = vmatpush1.bf16.msra.mxu0 0
      %1773 = vmatprep.subr.bf16.mxu0 0
      %1774 = vmatpush1.bf16.msra.mxu0 0
      %1775 = vmatprep.subr.bf16.mxu0 0
      %1776 = vmatpush1.bf16.msra.mxu0 0
      %1777 = vmatprep.subr.bf16.mxu0 0
      %1778 = vmatpush1.bf16.msra.mxu0 0
      %1779 = vmatprep.subr.bf16.mxu0 0
      %1780 = vmatpush1.bf16.msra.mxu0 0
      %1781 = vmatprep.mubr.bf16.mxu0 0
      %1782 = vmatmul.mubr.bf16.gmra.mrb[0].mxu0 %v1140
      %v1783 = vpop.f32.mrb[0].mxu0
      %v1784 = vadd.f32 0.0, %v1783
      %v1785 = vpop.f32.mrb[0].mxu0
      %v1786 = vpop.f32.mrb[0].mxu0
      %v1787 = vadd.f32 0.0, %v1786
      %v1788 = vpop.f32.mrb[0].mxu0
      %1789 = vmatprep.mubr.bf16.mxu0 0
      %1790 = vmatmul.mubr.bf16.gmra.mrb[0].mxu0 %v1141
      %v1791 = vpop.f32.mrb[0].mxu0
      %v1792 = vadd.f32 0.0, %v1791
      %v1793 = vpop.f32.mrb[0].mxu0
      %v1794 = vpop.f32.mrb[0].mxu0
      %v1795 = vadd.f32 0.0, %v1794
      %v1796 = vpop.f32.mrb[0].mxu0
      %1797 = vmatprep.mubr.bf16.mxu0 0
      %1798 = vmatmul.mubr.bf16.gmra.mrb[0].mxu0 %v1142
      %v1799 = vpop.f32.mrb[0].mxu0
      %v1800 = vadd.f32 0.0, %v1799
      %v1801 = vpop.f32.mrb[0].mxu0
      %v1802 = vpop.f32.mrb[0].mxu0
      %v1803 = vadd.f32 0.0, %v1802
      %v1804 = vpop.f32.mrb[0].mxu0
      %1805 = vmatprep.mubr.bf16.mxu0 0
      %1806 = vmatmul.mubr.bf16.gmra.mrb[0].mxu0 %v1143
      %v1807 = vpop.f32.mrb[0].mxu0
      %v1808 = vadd.f32 0.0, %v1807
      %v1809 = vpop.f32.mrb[0].mxu0
      %v1810 = vpop.f32.mrb[0].mxu0
      %v1811 = vadd.f32 0.0, %v1810
      %v1812 = vpop.f32.mrb[0].mxu0
      %1813 = vmatprep.mubr.bf16.mxu0 0
      %1814 = vmatmul.mubr.bf16.gmra.mrb[0].mxu0 %v1144
      %v1815 = vpop.f32.mrb[0].mxu0
      %v1816 = vadd.f32 0.0, %v1815
      %v1817 = vpop.f32.mrb[0].mxu0
      %v1818 = vpop.f32.mrb[0].mxu0
      %v1819 = vadd.f32 0.0, %v1818
      %v1820 = vpop.f32.mrb[0].mxu0
      %1821 = vmatprep.mubr.bf16.mxu0 0
      %1822 = vmatmul.mubr.bf16.gmra.mrb[0].mxu0 %v1145
      %v1823 = vpop.f32.mrb[0].mxu0
      %v1824 = vadd.f32 0.0, %v1823
      %v1825 = vpop.f32.mrb[0].mxu0
      %v1826 = vpop.f32.mrb[0].mxu0
      %v1827 = vadd.f32 0.0, %v1826
      %v1828 = vpop.f32.mrb[0].mxu0
      %1829 = vmatprep.mubr.bf16.mxu0 0
      %1830 = vmatmul.mubr.bf16.gmra.mrb[0].mxu0 %v1146
      %v1831 = vpop.f32.mrb[0].mxu0
      %v1832 = vadd.f32 0.0, %v1831
      %v1833 = vpop.f32.mrb[0].mxu0
      %v1834 = vpop.f32.mrb[0].mxu0
      %v1835 = vadd.f32 0.0, %v1834
      %v1836 = vpop.f32.mrb[0].mxu0
      %1837 = vmatprep.mubr.bf16.mxu0 0
      %1838 = vmatmul.mubr.bf16.gmra.mrb[0].mxu0 %v1699
      %v1839 = vpop.f32.mrb[0].mxu0
      %v1840 = vadd.f32 0.0, %v1839
      %v1841 = vpop.f32.mrb[0].mxu0
      %v1842 = vpop.f32.mrb[0].mxu0
      %v1843 = vadd.f32 0.0, %v1842
      %v1844 = vpop.f32.mrb[0].mxu0
      %1845 = vdwg.mxu0
      %v1846 = vadd.f32 %v1664, %v1784
      %v1847 = vadd.f32 %v1665, %v1787
      %v1848 = vadd.f32 %v1666, %v1792
      %v1849 = vadd.f32 %v1667, %v1795
      %v1850 = vadd.f32 %v1668, %v1800
      %v1851 = vadd.f32 %v1669, %v1803
      %v1852 = vadd.f32 %v1670, %v1808
      %v1853 = vadd.f32 %v1671, %v1811
      %v1854 = vadd.f32 %v1672, %v1816
      %v1855 = vadd.f32 %v1673, %v1819
      %v1856 = vadd.f32 %v1674, %v1824
      %v1857 = vadd.f32 %v1675, %v1827
      %v1858 = vadd.f32 %v1676, %v1832
      %v1859 = vadd.f32 %v1677, %v1835
      %v1860 = vadd.f32 %v1678, %v1840
      %v1861 = vadd.f32 %v1679, %v1843
      %s1862 = scalar_lea.vmem %s304, 384
      %v1863 = vld [vmem:[%s1862] sm:$0xf]
      %v1864 = vld [vmem:[%s1862 + $0x4] sm:$0xf]
      %v1865 = vld [vmem:[%s1862 + $0x8] sm:$0xf]
      %v1866 = vld [vmem:[%s1862 + $0xc] sm:$0xf]
      %v1867 = vld [vmem:[%s1862 + $0x10] sm:$0xf]
      %v1868 = vld [vmem:[%s1862 + $0x14] sm:$0xf]
      %v1869 = vld [vmem:[%s1862 + $0x18] sm:$0xf]
      %v1870 = vld [vmem:[%s1862 + $0x1c] sm:$0xf]
      %v1871 = vld [vmem:[%s1862 + $0x20] sm:$0xf]
      %v1872 = vld [vmem:[%s1862 + $0x24] sm:$0xf]
      %v1873 = vld [vmem:[%s1862 + $0x28] sm:$0xf]
      %v1874 = vld [vmem:[%s1862 + $0x2c] sm:$0xf]
      %v1875 = vld [vmem:[%s1862 + $0x30] sm:$0xf]
      %v1876 = vld [vmem:[%s1862 + $0x34] sm:$0xf]
      %v1877 = vld [vmem:[%s1862 + $0x38] sm:$0xf]
      %v1878 = vld [vmem:[%s1862 + $0x3c] sm:$0xf]
      %v1879 = vunpack.c.l.b16 %v370
      %v1880 = vunpack.c.l.b16 %v371
      %v1881 = vpack.c.b16 %v1880, %v1879
      %v1899 = vunpack.c.l.b16 %v1863
      %v1900 = vunpack.c.l.b16 %v1864
      %v1901 = vunpack.c.l.b16 %v1865
      %v1902 = vunpack.c.l.b16 %v1866
      %v1903 = vunpack.c.l.b16 %v1867
      %v1904 = vunpack.c.l.b16 %v1868
      %v1905 = vunpack.c.l.b16 %v1869
      %v1906 = vunpack.c.l.b16 %v1870
      %v1907 = vunpack.c.l.b16 %v1871
      %v1908 = vunpack.c.l.b16 %v1872
      %v1909 = vunpack.c.l.b16 %v1873
      %v1910 = vunpack.c.l.b16 %v1874
      %v1911 = vunpack.c.l.b16 %v1875
      %v1912 = vunpack.c.l.b16 %v1876
      %v1913 = vunpack.c.l.b16 %v1877
      %v1914 = vunpack.c.l.b16 %v1878
      %v1915 = vpack.c.b16 %v1900, %v1899
      %v1916 = vpack.c.b16 %v1902, %v1901
      %v1917 = vpack.c.b16 %v1904, %v1903
      %v1918 = vpack.c.b16 %v1906, %v1905
      %v1919 = vpack.c.b16 %v1908, %v1907
      %v1920 = vpack.c.b16 %v1910, %v1909
      %v1921 = vpack.c.b16 %v1912, %v1911
      %v1922 = vpack.c.b16 %v1914, %v1913
      %1931 = vmatprep.subr.bf16.mxu0 0
      %1932 = vmatpush1.bf16.msra.mxu0 %v1915
      %1933 = vmatprep.subr.bf16.mxu0 0
      %1934 = vmatpush1.bf16.msra.mxu0 %v1916
      %1935 = vmatprep.subr.bf16.mxu0 0
      %1936 = vmatpush1.bf16.msra.mxu0 %v1917
      %1937 = vmatprep.subr.bf16.mxu0 0
      %1938 = vmatpush1.bf16.msra.mxu0 %v1918
      %1939 = vmatprep.subr.bf16.mxu0 0
      %1940 = vmatpush1.bf16.msra.mxu0 %v1919
      %1941 = vmatprep.subr.bf16.mxu0 0
      %1942 = vmatpush1.bf16.msra.mxu0 %v1920
      %1943 = vmatprep.subr.bf16.mxu0 0
      %1944 = vmatpush1.bf16.msra.mxu0 %v1921
      %1945 = vmatprep.subr.bf16.mxu0 0
      %1946 = vmatpush1.bf16.msra.mxu0 %v1922
      %1947 = vmatprep.subr.bf16.mxu0 0
      %1948 = vmatpush1.bf16.msra.mxu0 0
      %1949 = vmatprep.subr.bf16.mxu0 0
      %1950 = vmatpush1.bf16.msra.mxu0 0
      %1951 = vmatprep.subr.bf16.mxu0 0
      %1952 = vmatpush1.bf16.msra.mxu0 0
      %1953 = vmatprep.subr.bf16.mxu0 0
      %1954 = vmatpush1.bf16.msra.mxu0 0
      %1955 = vmatprep.subr.bf16.mxu0 0
      %1956 = vmatpush1.bf16.msra.mxu0 0
      %1957 = vmatprep.subr.bf16.mxu0 0
      %1958 = vmatpush1.bf16.msra.mxu0 0
      %1959 = vmatprep.subr.bf16.mxu0 0
      %1960 = vmatpush1.bf16.msra.mxu0 0
      %1961 = vmatprep.subr.bf16.mxu0 0
      %1962 = vmatpush1.bf16.msra.mxu0 0
      %1963 = vmatprep.mubr.bf16.mxu0 0
      %1964 = vmatmul.mubr.bf16.gmra.mrb[0].mxu0 %v947
      %v1965 = vpop.f32.mrb[0].mxu0
      %v1966 = vadd.f32 0.0, %v1965
      %v1967 = vpop.f32.mrb[0].mxu0
      %v1968 = vpop.f32.mrb[0].mxu0
      %v1969 = vadd.f32 0.0, %v1968
      %v1970 = vpop.f32.mrb[0].mxu0
      %1971 = vmatprep.mubr.bf16.mxu0 0
      %1972 = vmatmul.mubr.bf16.gmra.mrb[0].mxu0 %v948
      %v1973 = vpop.f32.mrb[0].mxu0
      %v1974 = vadd.f32 0.0, %v1973
      %v1975 = vpop.f32.mrb[0].mxu0
      %v1976 = vpop.f32.mrb[0].mxu0
      %v1977 = vadd.f32 0.0, %v1976
      %v1978 = vpop.f32.mrb[0].mxu0
      %1979 = vmatprep.mubr.bf16.mxu0 0
      %1980 = vmatmul.mubr.bf16.gmra.mrb[0].mxu0 %v949
      %v1981 = vpop.f32.mrb[0].mxu0
      %v1982 = vadd.f32 0.0, %v1981
      %v1983 = vpop.f32.mrb[0].mxu0
      %v1984 = vpop.f32.mrb[0].mxu0
      %v1985 = vadd.f32 0.0, %v1984
      %v1986 = vpop.f32.mrb[0].mxu0
      %1987 = vmatprep.mubr.bf16.mxu0 0
      %1988 = vmatmul.mubr.bf16.gmra.mrb[0].mxu0 %v950
      %v1989 = vpop.f32.mrb[0].mxu0
      %v1990 = vadd.f32 0.0, %v1989
      %v1991 = vpop.f32.mrb[0].mxu0
      %v1992 = vpop.f32.mrb[0].mxu0
      %v1993 = vadd.f32 0.0, %v1992
      %v1994 = vpop.f32.mrb[0].mxu0
      %1995 = vmatprep.mubr.bf16.mxu0 0
      %1996 = vmatmul.mubr.bf16.gmra.mrb[0].mxu0 %v951
      %v1997 = vpop.f32.mrb[0].mxu0
      %v1998 = vadd.f32 0.0, %v1997
      %v1999 = vpop.f32.mrb[0].mxu0
      %v2000 = vpop.f32.mrb[0].mxu0
      %v2001 = vadd.f32 0.0, %v2000
      %v2002 = vpop.f32.mrb[0].mxu0
      %2003 = vmatprep.mubr.bf16.mxu0 0
      %2004 = vmatmul.mubr.bf16.gmra.mrb[0].mxu0 %v952
      %v2005 = vpop.f32.mrb[0].mxu0
      %v2006 = vadd.f32 0.0, %v2005
      %v2007 = vpop.f32.mrb[0].mxu0
      %v2008 = vpop.f32.mrb[0].mxu0
      %v2009 = vadd.f32 0.0, %v2008
      %v2010 = vpop.f32.mrb[0].mxu0
      %2011 = vmatprep.mubr.bf16.mxu0 0
      %2012 = vmatmul.mubr.bf16.gmra.mrb[0].mxu0 %v1335
      %v2013 = vpop.f32.mrb[0].mxu0
      %v2014 = vadd.f32 0.0, %v2013
      %v2015 = vpop.f32.mrb[0].mxu0
      %v2016 = vpop.f32.mrb[0].mxu0
      %v2017 = vadd.f32 0.0, %v2016
      %v2018 = vpop.f32.mrb[0].mxu0
      %2019 = vmatprep.mubr.bf16.mxu0 0
      %2020 = vmatmul.mubr.bf16.gmra.mrb[0].mxu0 %v1881
      %v2021 = vpop.f32.mrb[0].mxu0
      %v2022 = vadd.f32 0.0, %v2021
      %v2023 = vpop.f32.mrb[0].mxu0
      %v2024 = vpop.f32.mrb[0].mxu0
      %v2025 = vadd.f32 0.0, %v2024
      %v2026 = vpop.f32.mrb[0].mxu0
      %2027 = vdwg.mxu0
      %v2028 = vadd.f32 %v1846, %v1966
      %v2029 = vadd.f32 %v1847, %v1969
      %v2030 = vadd.f32 %v1848, %v1974
      %v2031 = vadd.f32 %v1849, %v1977
      %v2032 = vadd.f32 %v1850, %v1982
      %v2033 = vadd.f32 %v1851, %v1985
      %v2034 = vadd.f32 %v1852, %v1990
      %v2035 = vadd.f32 %v1853, %v1993
      %v2036 = vadd.f32 %v1854, %v1998
      %v2037 = vadd.f32 %v1855, %v2001
      %v2038 = vadd.f32 %v1856, %v2006
      %v2039 = vadd.f32 %v1857, %v2009
      %v2040 = vadd.f32 %v1858, %v2014
      %v2041 = vadd.f32 %v1859, %v2017
      %v2042 = vadd.f32 %v1860, %v2022
      %v2043 = vadd.f32 %v1861, %v2025
      %s2044 = scalar_lea.vmem %s304, 448
      %v2045 = vld [vmem:[%s2044] sm:$0xf]
      %v2046 = vld [vmem:[%s2044 + $0x4] sm:$0xf]
      %v2047 = vld [vmem:[%s2044 + $0x8] sm:$0xf]
      %v2048 = vld [vmem:[%s2044 + $0xc] sm:$0xf]
      %v2049 = vld [vmem:[%s2044 + $0x10] sm:$0xf]
      %v2050 = vld [vmem:[%s2044 + $0x14] sm:$0xf]
      %v2051 = vld [vmem:[%s2044 + $0x18] sm:$0xf]
      %v2052 = vld [vmem:[%s2044 + $0x1c] sm:$0xf]
      %v2053 = vld [vmem:[%s2044 + $0x20] sm:$0xf]
      %v2054 = vld [vmem:[%s2044 + $0x24] sm:$0xf]
      %v2055 = vld [vmem:[%s2044 + $0x28] sm:$0xf]
      %v2056 = vld [vmem:[%s2044 + $0x2c] sm:$0xf]
      %v2057 = vld [vmem:[%s2044 + $0x30] sm:$0xf]
      %v2058 = vld [vmem:[%s2044 + $0x34] sm:$0xf]
      %v2059 = vld [vmem:[%s2044 + $0x38] sm:$0xf]
      %v2060 = vld [vmem:[%s2044 + $0x3c] sm:$0xf]
      %v2061 = vunpack.c.l.b16 %v605
      %v2062 = vunpack.c.l.b16 %v615
      %v2063 = vpack.c.b16 %v2062, %v2061
      %v2081 = vunpack.c.l.b16 %v2045
      %v2082 = vunpack.c.l.b16 %v2046
      %v2083 = vunpack.c.l.b16 %v2047
      %v2084 = vunpack.c.l.b16 %v2048
      %v2085 = vunpack.c.l.b16 %v2049
      %v2086 = vunpack.c.l.b16 %v2050
      %v2087 = vunpack.c.l.b16 %v2051
      %v2088 = vunpack.c.l.b16 %v2052
      %v2089 = vunpack.c.l.b16 %v2053
      %v2090 = vunpack.c.l.b16 %v2054
      %v2091 = vunpack.c.l.b16 %v2055
      %v2092 = vunpack.c.l.b16 %v2056
      %v2093 = vunpack.c.l.b16 %v2057
      %v2094 = vunpack.c.l.b16 %v2058
      %v2095 = vunpack.c.l.b16 %v2059
      %v2096 = vunpack.c.l.b16 %v2060
      %v2097 = vpack.c.b16 %v2082, %v2081
      %v2098 = vpack.c.b16 %v2084, %v2083
      %v2099 = vpack.c.b16 %v2086, %v2085
      %v2100 = vpack.c.b16 %v2088, %v2087
      %v2101 = vpack.c.b16 %v2090, %v2089
      %v2102 = vpack.c.b16 %v2092, %v2091
      %v2103 = vpack.c.b16 %v2094, %v2093
      %v2104 = vpack.c.b16 %v2096, %v2095
      %2113 = vmatprep.subr.bf16.mxu0 0
      %2114 = vmatpush1.bf16.msra.mxu0 %v2097
      %2115 = vmatprep.subr.bf16.mxu0 0
      %2116 = vmatpush1.bf16.msra.mxu0 %v2098
      %2117 = vmatprep.subr.bf16.mxu0 0
      %2118 = vmatpush1.bf16.msra.mxu0 %v2099
      %2119 = vmatprep.subr.bf16.mxu0 0
      %2120 = vmatpush1.bf16.msra.mxu0 %v2100
      %2121 = vmatprep.subr.bf16.mxu0 0
      %2122 = vmatpush1.bf16.msra.mxu0 %v2101
      %2123 = vmatprep.subr.bf16.mxu0 0
      %2124 = vmatpush1.bf16.msra.mxu0 %v2102
      %2125 = vmatprep.subr.bf16.mxu0 0
      %2126 = vmatpush1.bf16.msra.mxu0 %v2103
      %2127 = vmatprep.subr.bf16.mxu0 0
      %2128 = vmatpush1.bf16.msra.mxu0 %v2104
      %2129 = vmatprep.subr.bf16.mxu0 0
      %2130 = vmatpush1.bf16.msra.mxu0 0
      %2131 = vmatprep.subr.bf16.mxu0 0
      %2132 = vmatpush1.bf16.msra.mxu0 0
      %2133 = vmatprep.subr.bf16.mxu0 0
      %2134 = vmatpush1.bf16.msra.mxu0 0
      %2135 = vmatprep.subr.bf16.mxu0 0
      %2136 = vmatpush1.bf16.msra.mxu0 0
      %2137 = vmatprep.subr.bf16.mxu0 0
      %2138 = vmatpush1.bf16.msra.mxu0 0
      %2139 = vmatprep.subr.bf16.mxu0 0
      %2140 = vmatpush1.bf16.msra.mxu0 0
      %2141 = vmatprep.subr.bf16.mxu0 0
      %2142 = vmatpush1.bf16.msra.mxu0 0
      %2143 = vmatprep.subr.bf16.mxu0 0
      %2144 = vmatpush1.bf16.msra.mxu0 0
      %2145 = vmatprep.mubr.bf16.mxu0 0
      %2146 = vmatmul.mubr.bf16.gmra.mrb[0].mxu0 %v770
      %v2147 = vpop.f32.mrb[0].mxu0
      %v2148 = vadd.f32 0.0, %v2147
      %v2149 = vpop.f32.mrb[0].mxu0
      %v2150 = vpop.f32.mrb[0].mxu0
      %v2151 = vadd.f32 0.0, %v2150
      %v2152 = vpop.f32.mrb[0].mxu0
      %2153 = vmatprep.mubr.bf16.mxu0 0
      %2154 = vmatmul.mubr.bf16.gmra.mrb[0].mxu0 %v771
      %v2155 = vpop.f32.mrb[0].mxu0
      %v2156 = vadd.f32 0.0, %v2155
      %v2157 = vpop.f32.mrb[0].mxu0
      %v2158 = vpop.f32.mrb[0].mxu0
      %v2159 = vadd.f32 0.0, %v2158
      %v2160 = vpop.f32.mrb[0].mxu0
      %2161 = vmatprep.mubr.bf16.mxu0 0
      %2162 = vmatmul.mubr.bf16.gmra.mrb[0].mxu0 %v772
      %v2163 = vpop.f32.mrb[0].mxu0
      %v2164 = vadd.f32 0.0, %v2163
      %v2165 = vpop.f32.mrb[0].mxu0
      %v2166 = vpop.f32.mrb[0].mxu0
      %v2167 = vadd.f32 0.0, %v2166
      %v2168 = vpop.f32.mrb[0].mxu0
      %2169 = vmatprep.mubr.bf16.mxu0 0
      %2170 = vmatmul.mubr.bf16.gmra.mrb[0].mxu0 %v773
      %v2171 = vpop.f32.mrb[0].mxu0
      %v2172 = vadd.f32 0.0, %v2171
      %v2173 = vpop.f32.mrb[0].mxu0
      %v2174 = vpop.f32.mrb[0].mxu0
      %v2175 = vadd.f32 0.0, %v2174
      %v2176 = vpop.f32.mrb[0].mxu0
      %2177 = vmatprep.mubr.bf16.mxu0 0
      %2178 = vmatmul.mubr.bf16.gmra.mrb[0].mxu0 %v774
      %v2179 = vpop.f32.mrb[0].mxu0
      %v2180 = vadd.f32 0.0, %v2179
      %v2181 = vpop.f32.mrb[0].mxu0
      %v2182 = vpop.f32.mrb[0].mxu0
      %v2183 = vadd.f32 0.0, %v2182
      %v2184 = vpop.f32.mrb[0].mxu0
      %2185 = vmatprep.mubr.bf16.mxu0 0
      %2186 = vmatmul.mubr.bf16.gmra.mrb[0].mxu0 %v775
      %v2187 = vpop.f32.mrb[0].mxu0
      %v2188 = vadd.f32 0.0, %v2187
      %v2189 = vpop.f32.mrb[0].mxu0
      %v2190 = vpop.f32.mrb[0].mxu0
      %v2191 = vadd.f32 0.0, %v2190
      %v2192 = vpop.f32.mrb[0].mxu0
      %2193 = vmatprep.mubr.bf16.mxu0 0
      %2194 = vmatmul.mubr.bf16.gmra.mrb[0].mxu0 %v1517
      %v2195 = vpop.f32.mrb[0].mxu0
      %v2196 = vadd.f32 0.0, %v2195
      %v2197 = vpop.f32.mrb[0].mxu0
      %v2198 = vpop.f32.mrb[0].mxu0
      %v2199 = vadd.f32 0.0, %v2198
      %v2200 = vpop.f32.mrb[0].mxu0
      %2201 = vmatprep.mubr.bf16.mxu0 0
      %2202 = vmatmul.mubr.bf16.gmra.mrb[0].mxu0 %v2063
      %v2203 = vpop.f32.mrb[0].mxu0
      %v2204 = vadd.f32 0.0, %v2203
      %v2205 = vpop.f32.mrb[0].mxu0
      %v2206 = vpop.f32.mrb[0].mxu0
      %v2207 = vadd.f32 0.0, %v2206
      %v2208 = vpop.f32.mrb[0].mxu0
      %2209 = vdwg.mxu0
      %v2210 = vadd.f32 %v2028, %v2148
      %v2211 = vadd.f32 %v2029, %v2151
      %v2212 = vadd.f32 %v2030, %v2156
      %v2213 = vadd.f32 %v2031, %v2159
      %v2214 = vadd.f32 %v2032, %v2164
      %v2215 = vadd.f32 %v2033, %v2167
      %v2216 = vadd.f32 %v2034, %v2172
      %v2217 = vadd.f32 %v2035, %v2175
      %v2218 = vadd.f32 %v2036, %v2180
      %v2219 = vadd.f32 %v2037, %v2183
      %v2220 = vadd.f32 %v2038, %v2188
      %v2221 = vadd.f32 %v2039, %v2191
      %v2222 = vadd.f32 %v2040, %v2196
      %v2223 = vadd.f32 %v2041, %v2199
      %v2224 = vadd.f32 %v2042, %v2204
      %v2225 = vadd.f32 %v2043, %v2207
      %s2226 = scalar_lea.vmem %s304, 512
      %v2227 = vld [vmem:[%s2226] sm:$0xf]
      %v2228 = vld [vmem:[%s2226 + $0x4] sm:$0xf]
      %v2229 = vld [vmem:[%s2226 + $0x8] sm:$0xf]
      %v2230 = vld [vmem:[%s2226 + $0xc] sm:$0xf]
      %v2231 = vld [vmem:[%s2226 + $0x10] sm:$0xf]
      %v2232 = vld [vmem:[%s2226 + $0x14] sm:$0xf]
      %v2233 = vld [vmem:[%s2226 + $0x18] sm:$0xf]
      %v2234 = vld [vmem:[%s2226 + $0x1c] sm:$0xf]
      %v2235 = vld [vmem:[%s2226 + $0x20] sm:$0xf]
      %v2236 = vld [vmem:[%s2226 + $0x24] sm:$0xf]
      %v2237 = vld [vmem:[%s2226 + $0x28] sm:$0xf]
      %v2238 = vld [vmem:[%s2226 + $0x2c] sm:$0xf]
      %v2239 = vld [vmem:[%s2226 + $0x30] sm:$0xf]
      %v2240 = vld [vmem:[%s2226 + $0x34] sm:$0xf]
      %v2241 = vld [vmem:[%s2226 + $0x38] sm:$0xf]
      %v2242 = vld [vmem:[%s2226 + $0x3c] sm:$0xf]
      %v2243 = vunpack.c.l.b16 %v715
      %v2244 = vunpack.c.l.b16 %v718
      %v2245 = vpack.c.b16 %v2244, %v2243
      %v2263 = vunpack.c.l.b16 %v2227
      %v2264 = vunpack.c.l.b16 %v2228
      %v2265 = vunpack.c.l.b16 %v2229
      %v2266 = vunpack.c.l.b16 %v2230
      %v2267 = vunpack.c.l.b16 %v2231
      %v2268 = vunpack.c.l.b16 %v2232
      %v2269 = vunpack.c.l.b16 %v2233
      %v2270 = vunpack.c.l.b16 %v2234
      %v2271 = vunpack.c.l.b16 %v2235
      %v2272 = vunpack.c.l.b16 %v2236
      %v2273 = vunpack.c.l.b16 %v2237
      %v2274 = vunpack.c.l.b16 %v2238
      %v2275 = vunpack.c.l.b16 %v2239
      %v2276 = vunpack.c.l.b16 %v2240
      %v2277 = vunpack.c.l.b16 %v2241
      %v2278 = vunpack.c.l.b16 %v2242
      %v2279 = vpack.c.b16 %v2264, %v2263
      %v2280 = vpack.c.b16 %v2266, %v2265
      %v2281 = vpack.c.b16 %v2268, %v2267
      %v2282 = vpack.c.b16 %v2270, %v2269
      %v2283 = vpack.c.b16 %v2272, %v2271
      %v2284 = vpack.c.b16 %v2274, %v2273
      %v2285 = vpack.c.b16 %v2276, %v2275
      %v2286 = vpack.c.b16 %v2278, %v2277
      %2295 = vmatprep.subr.bf16.mxu0 0
      %2296 = vmatpush1.bf16.msra.mxu0 %v2279
      %2297 = vmatprep.subr.bf16.mxu0 0
      %2298 = vmatpush1.bf16.msra.mxu0 %v2280
      %2299 = vmatprep.subr.bf16.mxu0 0
      %2300 = vmatpush1.bf16.msra.mxu0 %v2281
      %2301 = vmatprep.subr.bf16.mxu0 0
      %2302 = vmatpush1.bf16.msra.mxu0 %v2282
      %2303 = vmatprep.subr.bf16.mxu0 0
      %2304 = vmatpush1.bf16.msra.mxu0 %v2283
      %2305 = vmatprep.subr.bf16.mxu0 0
      %2306 = vmatpush1.bf16.msra.mxu0 %v2284
      %2307 = vmatprep.subr.bf16.mxu0 0
      %2308 = vmatpush1.bf16.msra.mxu0 %v2285
      %2309 = vmatprep.subr.bf16.mxu0 0
      %2310 = vmatpush1.bf16.msra.mxu0 %v2286
      %2311 = vmatprep.subr.bf16.mxu0 0
      %2312 = vmatpush1.bf16.msra.mxu0 0
      %2313 = vmatprep.subr.bf16.mxu0 0
      %2314 = vmatpush1.bf16.msra.mxu0 0
      %2315 = vmatprep.subr.bf16.mxu0 0
      %2316 = vmatpush1.bf16.msra.mxu0 0
      %2317 = vmatprep.subr.bf16.mxu0 0
      %2318 = vmatpush1.bf16.msra.mxu0 0
      %2319 = vmatprep.subr.bf16.mxu0 0
      %2320 = vmatpush1.bf16.msra.mxu0 0
      %2321 = vmatprep.subr.bf16.mxu0 0
      %2322 = vmatpush1.bf16.msra.mxu0 0
      %2323 = vmatprep.subr.bf16.mxu0 0
      %2324 = vmatpush1.bf16.msra.mxu0 0
      %2325 = vmatprep.subr.bf16.mxu0 0
      %2326 = vmatpush1.bf16.msra.mxu0 0
      %2327 = vmatprep.mubr.bf16.mxu0 0
      %2328 = vmatmul.mubr.bf16.gmra.mrb[0].mxu0 %v1141
      %v2329 = vpop.f32.mrb[0].mxu0
      %v2330 = vadd.f32 0.0, %v2329
      %v2331 = vpop.f32.mrb[0].mxu0
      %v2332 = vpop.f32.mrb[0].mxu0
      %v2333 = vadd.f32 0.0, %v2332
      %v2334 = vpop.f32.mrb[0].mxu0
      %2335 = vmatprep.mubr.bf16.mxu0 0
      %2336 = vmatmul.mubr.bf16.gmra.mrb[0].mxu0 %v1142
      %v2337 = vpop.f32.mrb[0].mxu0
      %v2338 = vadd.f32 0.0, %v2337
      %v2339 = vpop.f32.mrb[0].mxu0
      %v2340 = vpop.f32.mrb[0].mxu0
      %v2341 = vadd.f32 0.0, %v2340
      %v2342 = vpop.f32.mrb[0].mxu0
      %2343 = vmatprep.mubr.bf16.mxu0 0
      %2344 = vmatmul.mubr.bf16.gmra.mrb[0].mxu0 %v1143
      %v2345 = vpop.f32.mrb[0].mxu0
      %v2346 = vadd.f32 0.0, %v2345
      %v2347 = vpop.f32.mrb[0].mxu0
      %v2348 = vpop.f32.mrb[0].mxu0
      %v2349 = vadd.f32 0.0, %v2348
      %v2350 = vpop.f32.mrb[0].mxu0
      %2351 = vmatprep.mubr.bf16.mxu0 0
      %2352 = vmatmul.mubr.bf16.gmra.mrb[0].mxu0 %v1144
      %v2353 = vpop.f32.mrb[0].mxu0
      %v2354 = vadd.f32 0.0, %v2353
      %v2355 = vpop.f32.mrb[0].mxu0
      %v2356 = vpop.f32.mrb[0].mxu0
      %v2357 = vadd.f32 0.0, %v2356
      %v2358 = vpop.f32.mrb[0].mxu0
      %2359 = vmatprep.mubr.bf16.mxu0 0
      %2360 = vmatmul.mubr.bf16.gmra.mrb[0].mxu0 %v1145
      %v2361 = vpop.f32.mrb[0].mxu0
      %v2362 = vadd.f32 0.0, %v2361
      %v2363 = vpop.f32.mrb[0].mxu0
      %v2364 = vpop.f32.mrb[0].mxu0
      %v2365 = vadd.f32 0.0, %v2364
      %v2366 = vpop.f32.mrb[0].mxu0
      %2367 = vmatprep.mubr.bf16.mxu0 0
      %2368 = vmatmul.mubr.bf16.gmra.mrb[0].mxu0 %v1146
      %v2369 = vpop.f32.mrb[0].mxu0
      %v2370 = vadd.f32 0.0, %v2369
      %v2371 = vpop.f32.mrb[0].mxu0
      %v2372 = vpop.f32.mrb[0].mxu0
      %v2373 = vadd.f32 0.0, %v2372
      %v2374 = vpop.f32.mrb[0].mxu0
      %2375 = vmatprep.mubr.bf16.mxu0 0
      %2376 = vmatmul.mubr.bf16.gmra.mrb[0].mxu0 %v1699
      %v2377 = vpop.f32.mrb[0].mxu0
      %v2378 = vadd.f32 0.0, %v2377
      %v2379 = vpop.f32.mrb[0].mxu0
      %v2380 = vpop.f32.mrb[0].mxu0
      %v2381 = vadd.f32 0.0, %v2380
      %v2382 = vpop.f32.mrb[0].mxu0
      %2383 = vmatprep.mubr.bf16.mxu0 0
      %2384 = vmatmul.mubr.bf16.gmra.mrb[0].mxu0 %v2245
      %v2385 = vpop.f32.mrb[0].mxu0
      %v2386 = vadd.f32 0.0, %v2385
      %v2387 = vpop.f32.mrb[0].mxu0
      %v2388 = vpop.f32.mrb[0].mxu0
      %v2389 = vadd.f32 0.0, %v2388
      %v2390 = vpop.f32.mrb[0].mxu0
      %2391 = vdwg.mxu0
      %v2392 = vadd.f32 %v2210, %v2330
      %v2393 = vadd.f32 %v2211, %v2333
      %v2394 = vadd.f32 %v2212, %v2338
      %v2395 = vadd.f32 %v2213, %v2341
      %v2396 = vadd.f32 %v2214, %v2346
      %v2397 = vadd.f32 %v2215, %v2349
      %v2398 = vadd.f32 %v2216, %v2354
      %v2399 = vadd.f32 %v2217, %v2357
      %v2400 = vadd.f32 %v2218, %v2362
      %v2401 = vadd.f32 %v2219, %v2365
      %v2402 = vadd.f32 %v2220, %v2370
      %v2403 = vadd.f32 %v2221, %v2373
      %v2404 = vadd.f32 %v2222, %v2378
      %v2405 = vadd.f32 %v2223, %v2381
      %v2406 = vadd.f32 %v2224, %v2386
      %v2407 = vadd.f32 %v2225, %v2389
      %v2408 = vld [vmem:[#allocation2] sm:$0xff]
      %v2409 = vld [vmem:[#allocation2 + $0x8] sm:$0xff]
      %v2410 = vld [vmem:[#allocation2 + $0x10] sm:$0xff]
      %v2411 = vld [vmem:[#allocation2 + $0x18] sm:$0xff]
      %v2412 = vld [vmem:[#allocation2 + $0x20] sm:$0xff]
      %v2413 = vld [vmem:[#allocation2 + $0x28] sm:$0xff]
      %v2414 = vld [vmem:[#allocation2 + $0x30] sm:$0xff]
      %v2415 = vld [vmem:[#allocation2 + $0x38] sm:$0xff]
      %v2416 = vld [vmem:[#allocation2 + $0x40] sm:$0xff]
      %v2417 = vld [vmem:[#allocation2 + $0x48] sm:$0xff]
      %v2418 = vld [vmem:[#allocation2 + $0x50] sm:$0xff]
      %v2419 = vld [vmem:[#allocation2 + $0x58] sm:$0xff]
      %v2420 = vld [vmem:[#allocation2 + $0x60] sm:$0xff]
      %v2421 = vld [vmem:[#allocation2 + $0x68] sm:$0xff]
      %v2422 = vld [vmem:[#allocation2 + $0x70] sm:$0xff]
      %v2423 = vld [vmem:[#allocation2 + $0x78] sm:$0xff]
      %v2424 = vadd.f32 %v2408, %v2392
      %v2425 = vadd.f32 %v2409, %v2393
      %v2426 = vadd.f32 %v2410, %v2394
      %v2427 = vadd.f32 %v2411, %v2395
      %v2428 = vadd.f32 %v2412, %v2396
      %v2429 = vadd.f32 %v2413, %v2397
      %v2430 = vadd.f32 %v2414, %v2398
      %v2431 = vadd.f32 %v2415, %v2399
      %v2432 = vadd.f32 %v2416, %v2400
      %v2433 = vadd.f32 %v2417, %v2401
      %v2434 = vadd.f32 %v2418, %v2402
      %v2435 = vadd.f32 %v2419, %v2403
      %v2436 = vadd.f32 %v2420, %v2404
      %v2437 = vadd.f32 %v2421, %v2405
      %v2438 = vadd.f32 %v2422, %v2406
      %v2439 = vadd.f32 %v2423, %v2407
      %vm2440 = vcmask 523264
      %2441 = vst.msk [vmem:[#allocation2] sm:$0xff] %vm2440, %v2424
      %2442 = vst.msk [vmem:[#allocation2 + $0x8] sm:$0xff] %vm2440, %v2425
      %2443 = vst.msk [vmem:[#allocation2 + $0x10] sm:$0xff] %vm2440, %v2426
      %2444 = vst.msk [vmem:[#allocation2 + $0x18] sm:$0xff] %vm2440, %v2427
      %2445 = vst.msk [vmem:[#allocation2 + $0x20] sm:$0xff] %vm2440, %v2428
      %2446 = vst.msk [vmem:[#allocation2 + $0x28] sm:$0xff] %vm2440, %v2429
      %2447 = vst.msk [vmem:[#allocation2 + $0x30] sm:$0xff] %vm2440, %v2430
      %2448 = vst.msk [vmem:[#allocation2 + $0x38] sm:$0xff] %vm2440, %v2431
      %2449 = vst.msk [vmem:[#allocation2 + $0x40] sm:$0xff] %vm2440, %v2432
      %2450 = vst.msk [vmem:[#allocation2 + $0x48] sm:$0xff] %vm2440, %v2433
      %2451 = vst.msk [vmem:[#allocation2 + $0x50] sm:$0xff] %vm2440, %v2434
      %2452 = vst.msk [vmem:[#allocation2 + $0x58] sm:$0xff] %vm2440, %v2435
      %2453 = vst.msk [vmem:[#allocation2 + $0x60] sm:$0xff] %vm2440, %v2436
      %2454 = vst.msk [vmem:[#allocation2 + $0x68] sm:$0xff] %vm2440, %v2437
      %2455 = vst.msk [vmem:[#allocation2 + $0x70] sm:$0xff] %vm2440, %v2438
      %2456 = vst.msk [vmem:[#allocation2 + $0x78] sm:$0xff] %vm2440, %v2439
      // Predicated region
      $region49: #{tpu_custom_call.1} parent=43 // pred_check
        %p2457 = pneg %p319
      $region50: #{tpu_custom_call.1} parent=43 // pred_check_branch
        %2459 = sbr.rel (%p2457) target = $region52
      $region51: #{tpu_custom_call.1} parent=43 // pred_region
        %v2460 = vld [vmem:[#allocation2] sm:$0xff]
        %v2461 = vld [vmem:[#allocation2 + $0x8] sm:$0xff]
        %v2462 = vld [vmem:[#allocation2 + $0x10] sm:$0xff]
        %v2463 = vld [vmem:[#allocation2 + $0x18] sm:$0xff]
        %v2464 = vld [vmem:[#allocation2 + $0x20] sm:$0xff]
        %v2465 = vld [vmem:[#allocation2 + $0x28] sm:$0xff]
        %v2466 = vld [vmem:[#allocation2 + $0x30] sm:$0xff]
        %v2467 = vld [vmem:[#allocation2 + $0x38] sm:$0xff]
        %v2468 = vld [vmem:[#allocation2 + $0x40] sm:$0xff]
        %v2469 = vld [vmem:[#allocation2 + $0x48] sm:$0xff]
        %v2470 = vld [vmem:[#allocation2 + $0x50] sm:$0xff]
        %v2471 = vld [vmem:[#allocation2 + $0x58] sm:$0xff]
        %v2472 = vld [vmem:[#allocation2 + $0x60] sm:$0xff]
        %v2473 = vld [vmem:[#allocation2 + $0x68] sm:$0xff]
        %v2474 = vld [vmem:[#allocation2 + $0x70] sm:$0xff]
        %v2475 = vld [vmem:[#allocation2 + $0x78] sm:$0xff]
        %v2476 = vld [vmem:[%s2] sm:$0x1]
        %v2478 = vlaneseq
        %v2479 = vshrl.u32 %v2478, 7
        %v2480 = vsub.s32 0, %v2479
        %v2481 = vrot.slane %v2476, %v2480
        %v2483 = vmul.f32 %v2460, %v2481
        %v2484 = vmul.f32 %v2461, %v2481
        %v2485 = vmul.f32 %v2462, %v2481
        %v2486 = vmul.f32 %v2463, %v2481
        %v2487 = vmul.f32 %v2464, %v2481
        %v2488 = vmul.f32 %v2465, %v2481
        %v2489 = vmul.f32 %v2466, %v2481
        %v2490 = vmul.f32 %v2467, %v2481
        %v2491 = vmul.f32 %v2468, %v2481
        %v2492 = vmul.f32 %v2469, %v2481
        %v2493 = vmul.f32 %v2470, %v2481
        %v2494 = vmul.f32 %v2471, %v2481
        %v2495 = vmul.f32 %v2472, %v2481
        %v2496 = vmul.f32 %v2473, %v2481
        %v2497 = vmul.f32 %v2474, %v2481
        %v2498 = vmul.f32 %v2475, %v2481
        %v2499 = vld [vmem:[%s3] sm:$0x1]
        %v2501 = vlaneseq
        %v2502 = vshrl.u32 %v2501, 7
        %v2503 = vsub.s32 0, %v2502
        %v2504 = vrot.slane %v2499, %v2503
        %v2506 = vadd.f32 %v2483, %v2504
        %v2507 = vadd.f32 %v2484, %v2504
        %v2508 = vadd.f32 %v2485, %v2504
        %v2509 = vadd.f32 %v2486, %v2504
        %v2510 = vadd.f32 %v2487, %v2504
        %v2511 = vadd.f32 %v2488, %v2504
        %v2512 = vadd.f32 %v2489, %v2504
        %v2513 = vadd.f32 %v2490, %v2504
        %v2514 = vadd.f32 %v2491, %v2504
        %v2515 = vadd.f32 %v2492, %v2504
        %v2516 = vadd.f32 %v2493, %v2504
        %v2517 = vadd.f32 %v2494, %v2504
        %v2518 = vadd.f32 %v2495, %v2504
        %v2519 = vadd.f32 %v2496, %v2504
        %v2520 = vadd.f32 %v2497, %v2504
        %v2521 = vadd.f32 %v2498, %v2504
        %v2522 = vmax.f32 %v2506, 0.0
        %v2523 = vmax.f32 %v2507, 0.0
        %v2524 = vmax.f32 %v2508, 0.0
        %v2525 = vmax.f32 %v2509, 0.0
        %v2526 = vmax.f32 %v2510, 0.0
        %v2527 = vmax.f32 %v2511, 0.0
        %v2528 = vmax.f32 %v2512, 0.0
        %v2529 = vmax.f32 %v2513, 0.0
        %v2530 = vmax.f32 %v2514, 0.0
        %v2531 = vmax.f32 %v2515, 0.0
        %v2532 = vmax.f32 %v2516, 0.0
        %v2533 = vmax.f32 %v2517, 0.0
        %v2534 = vmax.f32 %v2518, 0.0
        %v2535 = vmax.f32 %v2519, 0.0
        %v2536 = vmax.f32 %v2520, 0.0
        %v2537 = vmax.f32 %v2521, 0.0
        %v2538 = vpack.c.bf16 %v2523, %v2522
        %v2539 = vpack.c.bf16 %v2525, %v2524
        %v2540 = vpack.c.bf16 %v2527, %v2526
        %v2541 = vpack.c.bf16 %v2529, %v2528
        %v2542 = vpack.c.bf16 %v2531, %v2530
        %v2543 = vpack.c.bf16 %v2533, %v2532
        %v2544 = vpack.c.bf16 %v2535, %v2534
        %v2545 = vpack.c.bf16 %v2537, %v2536
        %v2546 = vld [vmem:[%s4] sm:$0xf]
        %v2547 = vld [vmem:[%s4 + $0x4] sm:$0xf]
        %v2548 = vld [vmem:[%s4 + $0x8] sm:$0xf]
        %v2549 = vld [vmem:[%s4 + $0xc] sm:$0xf]
        %v2550 = vld [vmem:[%s4 + $0x10] sm:$0xf]
        %v2551 = vld [vmem:[%s4 + $0x14] sm:$0xf]
        %v2552 = vld [vmem:[%s4 + $0x18] sm:$0xf]
        %v2553 = vld [vmem:[%s4 + $0x1c] sm:$0xf]
        %v2554 = vld [vmem:[%s5] sm:$0x1]
        %v2556 = vlaneseq
        %v2557 = vshrl.u32 %v2556, 7
        %v2558 = vsub.s32 0, %v2557
        %v2559 = vrot.slane %v2554, %v2558
        %v2569 = vunpack.c.l.b16 %v2546
        %v2570 = vunpack.c.l.b16 %v2547
        %v2571 = vunpack.c.l.b16 %v2548
        %v2572 = vunpack.c.l.b16 %v2549
        %v2573 = vunpack.c.l.b16 %v2550
        %v2574 = vunpack.c.l.b16 %v2551
        %v2575 = vunpack.c.l.b16 %v2552
        %v2576 = vunpack.c.l.b16 %v2553
        %v2577 = vpack.c.b16 %v2570, %v2569
        %v2578 = vpack.c.b16 %v2572, %v2571
        %v2579 = vpack.c.b16 %v2574, %v2573
        %v2580 = vpack.c.b16 %v2576, %v2575
        %v2586 = vsel %vm2440, %v2538, 0
        %v2589 = vsel %vm2440, %v2539, 0
        %v2592 = vsel %vm2440, %v2540, 0
        %v2595 = vsel %vm2440, %v2541, 0
        %v2598 = vsel %vm2440, %v2542, 0
        %v2601 = vsel %vm2440, %v2543, 0
        %v2604 = vsel %vm2440, %v2544, 0
        %v2607 = vsel %vm2440, %v2545, 0
        %2609 = vmatprep.subr.bf16.mxu0 0
        %2610 = vmatpush1.bf16.msra.mxu0 %v2577
        %2611 = vmatprep.subr.bf16.mxu0 0
        %2612 = vmatpush1.bf16.msra.mxu0 %v2578
        %2613 = vmatprep.subr.bf16.mxu0 0
        %2614 = vmatpush1.bf16.msra.mxu0 %v2579
        %2615 = vmatprep.subr.bf16.mxu0 0
        %2616 = vmatpush1.bf16.msra.mxu0 %v2580
        %2617 = vmatprep.subr.bf16.mxu0 0
        %2618 = vmatpush1.bf16.msra.mxu0 0
        %2619 = vmatprep.subr.bf16.mxu0 0
        %2620 = vmatpush1.bf16.msra.mxu0 0
        %2621 = vmatprep.subr.bf16.mxu0 0
        %2622 = vmatpush1.bf16.msra.mxu0 0
        %2623 = vmatprep.subr.bf16.mxu0 0
        %2624 = vmatpush1.bf16.msra.mxu0 0
        %2625 = vmatprep.subr.bf16.mxu0 0
        %2626 = vmatpush1.bf16.msra.mxu0 0
        %2627 = vmatprep.subr.bf16.mxu0 0
        %2628 = vmatpush1.bf16.msra.mxu0 0
        %2629 = vmatprep.subr.bf16.mxu0 0
        %2630 = vmatpush1.bf16.msra.mxu0 0
        %2631 = vmatprep.subr.bf16.mxu0 0
        %2632 = vmatpush1.bf16.msra.mxu0 0
        %2633 = vmatprep.subr.bf16.mxu0 0
        %2634 = vmatpush1.bf16.msra.mxu0 0
        %2635 = vmatprep.subr.bf16.mxu0 0
        %2636 = vmatpush1.bf16.msra.mxu0 0
        %2637 = vmatprep.subr.bf16.mxu0 0
        %2638 = vmatpush1.bf16.msra.mxu0 0
        %2639 = vmatprep.subr.bf16.mxu0 0
        %2640 = vmatpush1.bf16.msra.mxu0 0
        %2641 = vmatprep.mubr.bf16.mxu0 0
        %2642 = vmatmul.mubr.bf16.gmra.mrb[0].mxu0 %v2586
        %v2643 = vpop.f32.mrb[0].mxu0
        %v2644 = vadd.f32 %v2559, %v2643
        %v2645 = vpop.f32.mrb[0].mxu0
        %v2646 = vpop.f32.mrb[0].mxu0
        %v2647 = vadd.f32 %v2559, %v2646
        %v2648 = vpop.f32.mrb[0].mxu0
        %2649 = vmatprep.mubr.bf16.mxu0 0
        %2650 = vmatmul.mubr.bf16.gmra.mrb[0].mxu0 %v2589
        %v2651 = vpop.f32.mrb[0].mxu0
        %v2652 = vadd.f32 %v2559, %v2651
        %v2653 = vpop.f32.mrb[0].mxu0
        %v2654 = vpop.f32.mrb[0].mxu0
        %v2655 = vadd.f32 %v2559, %v2654
        %v2656 = vpop.f32.mrb[0].mxu0
        %2657 = vmatprep.mubr.bf16.mxu0 0
        %2658 = vmatmul.mubr.bf16.gmra.mrb[0].mxu0 %v2592
        %v2659 = vpop.f32.mrb[0].mxu0
        %v2660 = vadd.f32 %v2559, %v2659
        %v2661 = vpop.f32.mrb[0].mxu0
        %v2662 = vpop.f32.mrb[0].mxu0
        %v2663 = vadd.f32 %v2559, %v2662
        %v2664 = vpop.f32.mrb[0].mxu0
        %2665 = vmatprep.mubr.bf16.mxu0 0
        %2666 = vmatmul.mubr.bf16.gmra.mrb[0].mxu0 %v2595
        %v2667 = vpop.f32.mrb[0].mxu0
        %v2668 = vadd.f32 %v2559, %v2667
        %v2669 = vpop.f32.mrb[0].mxu0
        %v2670 = vpop.f32.mrb[0].mxu0
        %v2671 = vadd.f32 %v2559, %v2670
        %v2672 = vpop.f32.mrb[0].mxu0
        %2673 = vmatprep.mubr.bf16.mxu0 0
        %2674 = vmatmul.mubr.bf16.gmra.mrb[0].mxu0 %v2598
        %v2675 = vpop.f32.mrb[0].mxu0
        %v2676 = vadd.f32 %v2559, %v2675
        %v2677 = vpop.f32.mrb[0].mxu0
        %v2678 = vpop.f32.mrb[0].mxu0
        %v2679 = vadd.f32 %v2559, %v2678
        %v2680 = vpop.f32.mrb[0].mxu0
        %2681 = vmatprep.mubr.bf16.mxu0 0
        %2682 = vmatmul.mubr.bf16.gmra.mrb[0].mxu0 %v2601
        %v2683 = vpop.f32.mrb[0].mxu0
        %v2684 = vadd.f32 %v2559, %v2683
        %v2685 = vpop.f32.mrb[0].mxu0
        %v2686 = vpop.f32.mrb[0].mxu0
        %v2687 = vadd.f32 %v2559, %v2686
        %v2688 = vpop.f32.mrb[0].mxu0
        %2689 = vmatprep.mubr.bf16.mxu0 0
        %2690 = vmatmul.mubr.bf16.gmra.mrb[0].mxu0 %v2604
        %v2691 = vpop.f32.mrb[0].mxu0
        %v2692 = vadd.f32 %v2559, %v2691
        %v2693 = vpop.f32.mrb[0].mxu0
        %v2694 = vpop.f32.mrb[0].mxu0
        %v2695 = vadd.f32 %v2559, %v2694
        %v2696 = vpop.f32.mrb[0].mxu0
        %2697 = vmatprep.mubr.bf16.mxu0 0
        %2698 = vmatmul.mubr.bf16.gmra.mrb[0].mxu0 %v2607
        %v2699 = vpop.f32.mrb[0].mxu0
        %v2700 = vadd.f32 %v2559, %v2699
        %v2701 = vpop.f32.mrb[0].mxu0
        %v2702 = vpop.f32.mrb[0].mxu0
        %v2703 = vadd.f32 %v2559, %v2702
        %v2704 = vpop.f32.mrb[0].mxu0
        %2705 = vdwg.mxu0
        %vm2706 = vcmask 64512
        %2707 = vst.msk [vmem:[%s315] sm:$0xff] %vm2706, %v2644
        %2708 = vst.msk [vmem:[%s315 + $0x8] sm:$0xff] %vm2706, %v2647
        %2709 = vst.msk [vmem:[%s315 + $0x10] sm:$0xff] %vm2706, %v2652
        %2710 = vst.msk [vmem:[%s315 + $0x18] sm:$0xff] %vm2706, %v2655
        %2711 = vst.msk [vmem:[%s315 + $0x20] sm:$0xff] %vm2706, %v2660
        %2712 = vst.msk [vmem:[%s315 + $0x28] sm:$0xff] %vm2706, %v2663
        %2713 = vst.msk [vmem:[%s315 + $0x30] sm:$0xff] %vm2706, %v2668
        %2714 = vst.msk [vmem:[%s315 + $0x38] sm:$0xff] %vm2706, %v2671
        %2715 = vst.msk [vmem:[%s315 + $0x40] sm:$0xff] %vm2706, %v2676
        %2716 = vst.msk [vmem:[%s315 + $0x48] sm:$0xff] %vm2706, %v2679
        %2717 = vst.msk [vmem:[%s315 + $0x50] sm:$0xff] %vm2706, %v2684
        %2718 = vst.msk [vmem:[%s315 + $0x58] sm:$0xff] %vm2706, %v2687
        %2719 = vst.msk [vmem:[%s315 + $0x60] sm:$0xff] %vm2706, %v2692
        %2720 = vst.msk [vmem:[%s315 + $0x68] sm:$0xff] %vm2706, %v2695
        %2721 = vst.msk [vmem:[%s315 + $0x70] sm:$0xff] %vm2706, %v2700
        %2722 = vst.msk [vmem:[%s315 + $0x78] sm:$0xff] %vm2706, %v2703
      $region52: #{tpu_custom_call.1} parent=43 // pred_fallthru
        _
      %s2723 = smul.u32 8, %s23
      %p2724 = scmp.lt.s32.totalorder %s22, 1
      %s2725 = scalar_select %p2724, %s22, 1
      %p2726 = scmp.lt.s32.totalorder %s2723, 15
      %s2727 = scalar_select %p2726, %s2723, 15
      %s2728 = smul.addr %s2727, 2
      %s2729 = smul.addr %s2725, 32
      %s2730 = sadd.s32 %s2728, %s2729
      %s2731 = smul.addr %s2730, 8
      %s2732 = scalar_lea.vmem %s6, %s2731
      // Predicated region
      $region53: #{tpu_custom_call.1} parent=43 // pred_check
        %p2733 = pneg %p194
      $region54: #{tpu_custom_call.1} parent=43 // pred_check_branch
        %2735 = sbr.rel (%p2733) target = $region56
      $region55: #{tpu_custom_call.1} parent=43 // pred_region
        %s2736 = smul.u32 8, %s23
      $region56: #{tpu_custom_call.1} parent=43 // pred_fallthru
        _
    $region44: #{tpu_custom_call.1} parent=5 // pred_fallthru
      _
    %p2737 = scmp.le.s32.totalorder 2, %s12
    // Predicated region
    $region57: #{tpu_custom_call.1} parent=5 // pred_check
      %p2738 = pneg %p2737
    $region58: #{tpu_custom_call.1} parent=5 // pred_check_branch
      %2740 = sbr.rel (%p2738) target = $region60
    $region59: #{tpu_custom_call.1} parent=5 // pred_region
      %s2741 = ssub.s32 %s12, 2
      // Predicated region
      $region61: #{tpu_custom_call.1} parent=59 // pred_check
        %p2742 = pneg %p200
      $region62: #{tpu_custom_call.1} parent=59 // pred_check_branch
        %2744 = sbr.rel (%p2742) target = $region64
      $region63: #{tpu_custom_call.1} parent=59 // pred_region
        %s2745 = smul.u32 8, %s26
        %p2746 = scmp.lt.s32.totalorder %s25, 1
        %s2747 = scalar_select %p2746, %s25, 1
        %p2748 = scmp.lt.s32.totalorder %s2745, 15
        %s2749 = scalar_select %p2748, %s2745, 15
        %s2750 = smul.addr %s2749, 2
        %s2751 = smul.addr %s2747, 32
        %s2752 = sadd.s32 %s2750, %s2751
        %s2753 = smul.addr %s2752, 8
        %s2754 = scalar_lea.vmem %s6, %s2753
      $region64: #{tpu_custom_call.1} parent=59 // pred_fallthru
        _
    $region60: #{tpu_custom_call.1} parent=5 // pred_fallthru
      _
  $region6: #{tpu_custom_call.1} parent=0 // loop_footer
    %s16 = sadd.s32 1, %s12
  $region7: #{tpu_custom_call.1} parent=0 // loop_footer_branch
    %11 = sbr.rel target = $region3
  $region8: #{tpu_custom_call.1} parent=0 // loop_exit
    _

</llo_original>
